<compile_context>
chip_gen: v7x
topology: tpu7x:2x2x1
jax: 0.10.0
libtpu: 0.0.40
codegen_flags: <defaults>
</compile_context>

<pallas_src>
from functools import partial

import numpy as np
import jax
import jax.numpy as jnp
from jax.experimental import pallas as pl
from jax.experimental.pallas import tpu as pltpu

# Real-model dims: feature 2048, sin/cos dim 256 (-> 2048 coord embed),
# Linear 4096 -> 768.  Scaled down here, structure preserved.
FEAT_DIM   = 256                       # per-box precomputed visual feature (real: 2048)
SINCOS_DIM = 32                        # coordinate sin/cos dim (real: 256)
SIN4       = 4 * SINCOS_DIM            # batched angle width (real: 1024)
COORD_FLAT = 2 * SIN4                  # flattened coordinate embedding (real: 2048)
IN_DIM     = COORD_FLAT + FEAT_DIM     # obj_downsample Linear input (real: 4096)
FINAL_DIM  = 128                       # final_dim (real: 768)


def _round_up(x, m):
    return ((x + m - 1) // m) * m


def _pick_tm(bn):
    """Row-tile size.  256 fills the 256-wide MXUs of v6e/v7x at large BN
    (128 is already matched to v5e's 4x128^2 MXU); for small BN the tile is
    capped so the grid has >=2 steps and both v7x TensorCores get work."""
    if bn >= 1024:
        return 256
    if bn >= 256:
        return 128
    return max(8, _round_up(max(1, -(-bn // 2)), 8))


def _make_head_kernel(angle_precision):
    """Fused coordinate_embeddings + obj_downsample Linear + ReLU for TM boxes."""
    def kernel(pos_ref, feat_ref, scale4_ref, w_sc_ref, w_feat_ref, bias_ref,
               out_ref, sincos_ref):
        # Batched angle tensor: ang[k, p*S + d] = pos[k, p] * 100 / dim_mat[d]
        # (constant 100/dim_mat folded into the block-diagonal scale4 matrix).
        # precision=HIGHEST keeps the f32 angles (up to ~100 rad) exact.
        ang = jnp.dot(pos_ref[...], scale4_ref[...],
                      preferred_element_type=jnp.float32,
                      precision=angle_precision)                 # [TM, SIN4] f32

        # sin | cos packed into one contiguous bf16 buffer (two lane-dense
        # stores) -> a single MXU dot against the stacked coord weight.
        sincos_ref[:, :SIN4] = jnp.sin(ang).astype(jnp.bfloat16)
        sincos_ref[:, SIN4:] = jnp.cos(ang).astype(jnp.bfloat16)

        acc = jnp.dot(sincos_ref[...], w_sc_ref[...],
                      preferred_element_type=jnp.float32)
        acc = acc + jnp.dot(feat_ref[...], w_feat_ref[...],
                            preferred_element_type=jnp.float32)
        acc = acc + bias_ref[...]
        out_ref[...] = jnp.maximum(acc, 0.0).astype(out_ref.dtype)
    return kernel


def _vmem_limit_bytes(tm):
    # Resident operands (worst case: pipeline keeps 2 buffers each).
    resident = 2 * ((2 * SIN4 + FEAT_DIM) * FINAL_DIM * 2        # bf16 weights
                    + 8 * SIN4 * 4 + FINAL_DIM * 4)              # scale4 + bias f32
    # Per-grid-step tiles, double-buffered (pos lane-padded to 128).
    per_step = 2 * (tm * 128 * 4 + tm * FEAT_DIM * 2 + tm * FINAL_DIM * 2)
    scratch = tm * 2 * SIN4 * 2
    need = resident + per_step + scratch
    # 2x headroom for Mosaic-internal scratch; never request more than 32 MiB
    # so the budget stays well inside v7x's 64 MiB/TC physical VMEM.
    return int(min(32 * 1024 * 1024, max(8 * 1024 * 1024, 2 * need)))


def _run_head(pos, feats, scale4, w_sincos, w_feat, bias, tm, compat_mode):
    bn = pos.shape[0]
    grid = (pl.cdiv(bn, tm),)

    if compat_mode:
        angle_precision = None

        def resident(shape):
            return pl.BlockSpec(shape, lambda i: (0, 0))
    else:
        angle_precision = jax.lax.Precision.HIGHEST

        def resident(shape):
            # constant index_map -> block stays resident; single-buffer it to
            # halve its VMEM footprint (matters at real dims on v7x).
            return pl.BlockSpec(shape, lambda i: (0, 0),
                                pipeline_mode=pl.Buffered(1))

    flops = 2 * bn * (8 * SIN4 + 2 * SIN4 * FINAL_DIM + FEAT_DIM * FINAL_DIM)
    bytes_accessed = (bn * 8 * 4 + feats.size * 2 + scale4.size * 4
                      + (w_sincos.size + w_feat.size) * 2
                      + bias.size * 4 + bn * FINAL_DIM * 2)

    return pl.pallas_call(
        _make_head_kernel(angle_precision),
        out_shape=jax.ShapeDtypeStruct((bn, FINAL_DIM), jnp.bfloat16),
        grid=grid,
        in_specs=[
            pl.BlockSpec((tm, 8),                lambda i: (i, 0)),   # pos (f32, 4 used)
            pl.BlockSpec((tm, FEAT_DIM),         lambda i: (i, 0)),   # visual feats (bf16)
            resident((8, SIN4)),                                       # scale4 (f32)
            resident((2 * SIN4, FINAL_DIM)),                           # [w_sin; w_cos] (bf16)
            resident((FEAT_DIM, FINAL_DIM)),                           # w_feat (bf16)
            resident((1, FINAL_DIM)),                                  # bias (f32)
        ],
        out_specs=pl.BlockSpec((tm, FINAL_DIM), lambda i: (i, 0)),
        scratch_shapes=[pltpu.VMEM((tm, 2 * SIN4), jnp.bfloat16)],
        compiler_params=pltpu.CompilerParams(
            dimension_semantics=("parallel",),
            vmem_limit_bytes=_vmem_limit_bytes(tm)),
        cost_estimate=pl.CostEstimate(
            flops=flops,
            transcendentals=2 * bn * SIN4,
            bytes_accessed=bytes_accessed),
    )(pos, feats, scale4, w_sincos, w_feat, bias)


@partial(jax.jit, static_argnames=("compat_mode",))
def fast_rcnn_forward(boxes, box_mask, im_info, w, bias, compat_mode=False):
    """boxes: [B, N, 4+FEAT_DIM], box_mask: [B, N] bool, im_info: [B, 3] (w, h, scale)."""
    B, N = box_mask.shape
    BN = B * N
    tm = _pick_tm(BN)

    box4 = boxes[..., :4].reshape(BN, 4).astype(jnp.float32)
    feats_raw = boxes[..., 4:].astype(jnp.float32)                     # [B, N, FEAT_DIM]
    feats_bf16 = feats_raw.reshape(BN, FEAT_DIM).astype(jnp.bfloat16)  # kernel path (no pad copy)

    # normalized (xc/w, yc/h, wb/w, hb/h); the *100/dim_mat factor lives in scale4.
    wh = jnp.broadcast_to(im_info[:, None, :2], (B, N, 2)).reshape(BN, 2).astype(jnp.float32)
    inv_w, inv_h = 1.0 / wh[:, 0], 1.0 / wh[:, 1]
    x1, y1, x2, y2 = box4[:, 0], box4[:, 1], box4[:, 2], box4[:, 3]
    zero = jnp.zeros_like(x1)
    pos = jnp.stack([(x1 + x2) * 0.5 * inv_w,
                     (y1 + y2) * 0.5 * inv_h,
                     (x2 - x1) * inv_w,
                     (y2 - y1) * inv_h,
                     zero, zero, zero, zero], axis=1)                  # [BN, 8] f32

    # block-diagonal scale: scale4[p, p*S + d] = 100 / dim_mat[d]  (rows padded to 8)
    scale_vec = 100.0 / (1000.0 ** (jnp.arange(SINCOS_DIM, dtype=jnp.float32) / SINCOS_DIM))
    scale4 = jnp.zeros((8, SIN4), jnp.float32).at[:4].set(
        jnp.kron(jnp.eye(4, dtype=jnp.float32), scale_vec[None, :]))

    # one-time weight-row permutation: interleaved per-position [sin|cos] rows
    # -> stacked [all-sin ; all-cos], so the kernel needs one coord-embed dot.
    w_coord = w[:COORD_FLAT].reshape(4, 2, SINCOS_DIM, FINAL_DIM)
    w_sincos = jnp.concatenate(
        [w_coord[:, 0].reshape(SIN4, FINAL_DIM),
         w_coord[:, 1].reshape(SIN4, FINAL_DIM)], axis=0).astype(jnp.bfloat16)
    w_feat = w[COORD_FLAT:].astype(jnp.bfloat16)

    # torch.nn.Dropout(p=0.1) is identity at inference.
    head = _run_head(pos, feats_bf16, scale4, w_sincos, w_feat,
                     bias.reshape(1, FINAL_DIM).astype(jnp.float32),
                     tm, compat_mode)                                  # [BN, FINAL_DIM] bf16
    head_bn = head.reshape(B, N, FINAL_DIM)

    # pad_sequence(...) compaction as a GATHER (scatters lower poorly on TPU):
    # src[b, j] = index of the j-th valid box in batch b; columns >= num_valid -> 0.
    valid_count = box_mask.sum(axis=1, dtype=jnp.int32)                # [B]
    src = jnp.argsort((~box_mask).astype(jnp.int32), axis=1, stable=True)  # [B, N]
    keep = (jnp.arange(N, dtype=jnp.int32)[None, :] < valid_count[:, None])[..., None]

    obj_reps = jnp.where(
        keep, jnp.take_along_axis(head_bn, src[:, :, None], axis=1),
        jnp.zeros((), jnp.bfloat16))
    obj_reps_raw = jnp.where(
        keep, jnp.take_along_axis(feats_raw, src[:, :, None], axis=1),
        jnp.zeros((), jnp.float32))
    return {"obj_reps_raw": obj_reps_raw, "obj_reps": obj_reps}


def _reference_forward(boxes, box_mask, im_info, w, bias):
    """Pure numpy reference mirroring the PyTorch forward (f32)."""
    boxes = np.asarray(boxes, np.float32)
    mask = np.asarray(box_mask)
    im_info = np.asarray(im_info, np.float32)
    w_np = np.asarray(w, np.float32)
    b_np = np.asarray(bias, np.float32).reshape(-1)
    B, N, _ = boxes.shape
    obj_reps = np.zeros((B, N, FINAL_DIM), np.float32)
    obj_reps_raw = np.zeros((B, N, FEAT_DIM), np.float32)
    dim_mat = 1000.0 ** (np.arange(SINCOS_DIM, dtype=np.float32) / SINCOS_DIM)
    for b in range(B):
        col = 0
        for n in range(N):
            if not mask[b, n]:
                continue
            x1, y1, x2, y2 = boxes[b, n, :4]
            feat = boxes[b, n, 4:]
            w_im, h_im = im_info[b, :2]
            pos = np.array([(x1 + x2) / 2 / w_im, (y1 + y2) / 2 / h_im,
                            (x2 - x1) / w_im, (y2 - y1) / h_im], np.float32) * 100.0
            ang = pos[:, None] / dim_mat[None, :]                      # [4, S]
            coord = np.concatenate([np.sin(ang), np.cos(ang)], -1).reshape(-1)  # [8S]
            x = np.concatenate([coord, feat])
            obj_reps[b, col] = np.maximum(x @ w_np + b_np, 0.0)
            obj_reps_raw[b, col] = feat
            col += 1
    return obj_reps, obj_reps_raw


if __name__ == "__main__":
    B, N = 2, 8
    key = jax.random.PRNGKey(0)
    k1, k2, k3, k4 = jax.random.split(key, 4)

    # boxes: [B, N, 4 + FEAT_DIM]  (coords + precomputed visual features)
    xy1 = jax.random.uniform(k1, (B, N, 2), minval=0.0, maxval=300.0)
    wh = jax.random.uniform(k2, (B, N, 2), minval=10.0, maxval=200.0)
    coords = jnp.concatenate([xy1, xy1 + wh], axis=-1)
    feats = jax.random.normal(k3, (B, N, FEAT_DIM), jnp.float32)
    boxes = jnp.concatenate([coords, feats], axis=-1)

    box_mask = jnp.array([[1, 1, 1, 0, 1, 1, 0, 0],
                          [1, 1, 1, 1, 1, 0, 1, 0]], dtype=bool)
    im_info = jnp.array([[640.0, 480.0, 1.0],
                         [512.0, 384.0, 1.0]], jnp.float32)

    # obj_downsample Linear parameters (deterministic synthetic init; [in, out] layout)
    w = 0.02 * jax.random.normal(k4, (IN_DIM, FINAL_DIM), jnp.float32)
    bias = 0.01 * jnp.ones((1, FINAL_DIM), jnp.float32)

    try:
        out = fast_rcnn_forward(boxes, box_mask, im_info, w, bias)
    except Exception:
        # Fallback if this JAX/Mosaic build rejects pl.Buffered(1) single
        # buffering or an explicit matmul precision inside Pallas.
        out = fast_rcnn_forward(boxes, box_mask, im_info, w, bias, compat_mode=True)

    jax.block_until_ready(out["obj_reps"])
    jax.block_until_ready(out["obj_reps_raw"])
    assert out["obj_reps"].shape == (B, N, FINAL_DIM)
    assert out["obj_reps_raw"].shape == (B, N, FEAT_DIM)

    # sanity check against a pure numpy reference of the PyTorch forward
    ref_reps, ref_raw = _reference_forward(boxes, box_mask, im_info, w, bias)
    np.testing.assert_allclose(np.asarray(out["obj_reps"].astype(jnp.float32)),
                               ref_reps, rtol=3e-2, atol=3e-2)
    np.testing.assert_allclose(np.asarray(out["obj_reps_raw"]), ref_raw,
                               rtol=1e-5, atol=1e-5)

    print("KERNEL_OK")
</pallas_src>

<mosaic_0001>
module attributes {stable_mosaic.version = 11 : i64} {
  func.func @kernel(%arg0: i32, %arg1: memref<8x8xf32, #tpu.memory_space<vmem>>, %arg2: memref<8x256xbf16, #tpu.memory_space<vmem>>, %arg3: memref<8x128xf32, #tpu.memory_space<vmem>>, %arg4: memref<256x128xbf16, #tpu.memory_space<vmem>>, %arg5: memref<256x128xbf16, #tpu.memory_space<vmem>>, %arg6: memref<1x128xf32, #tpu.memory_space<vmem>>, %arg7: memref<8x128xbf16, #tpu.memory_space<vmem>>, %arg8: memref<8x256xbf16, #tpu.memory_space<vmem>>) attributes {dimension_semantics = [#tpu.dimension_semantics<parallel>], iteration_bounds = array<i64: 2>, scalar_prefetch = 0 : i64, scratch_operands = 1 : i64, tpu.core_type = #tpu.core_type<tc>, window_params = [{transform_indices = @transform_0, window_bounds = array<i64: 8, 8>}, {transform_indices = @transform_1, window_bounds = array<i64: 8, 256>}, {pipeline_mode = #tpu.pipeline_mode<synchronous>, transform_indices = @transform_2, window_bounds = array<i64: 8, 128>}, {pipeline_mode = #tpu.pipeline_mode<synchronous>, transform_indices = @transform_3, window_bounds = array<i64: 256, 128>}, {pipeline_mode = #tpu.pipeline_mode<synchronous>, transform_indices = @transform_4, window_bounds = array<i64: 256, 128>}, {pipeline_mode = #tpu.pipeline_mode<synchronous>, transform_indices = @transform_5, window_bounds = array<i64: 1, 128>}, {transform_indices = @transform_6, window_bounds = array<i64: 8, 128>}]} {
    %c0 = arith.constant 0 : index
    %c0_0 = arith.constant 0 : index
    %0 = vector.load %arg1[%c0, %c0_0] : memref<8x8xf32, #tpu.memory_space<vmem>>, vector<8x8xf32>
    %c0_1 = arith.constant 0 : index
    %c0_2 = arith.constant 0 : index
    %1 = vector.load %arg3[%c0_1, %c0_2] : memref<8x128xf32, #tpu.memory_space<vmem>>, vector<8x128xf32>
    %cst = arith.constant dense<0.000000e+00> : vector<8x128xf32>
    %2 = tpu.matmul %0, %1, %cst {dimension_numbers = #tpu.dot_dimension_numbers<[1], [0], [0], [1], [0, 0, 1, 1], [], []>, precision = #tpu.contract_precision<fp32>} : vector<8x8xf32>, vector<8x128xf32>, vector<8x128xf32> -> vector<8x128xf32>
    %3 = math.sin %2 : vector<8x128xf32>
    %4 = arith.truncf %3 : vector<8x128xf32> to vector<8x128xbf16>
    %c0_3 = arith.constant 0 : index
    %c0_4 = arith.constant 0 : index
    %5 = vector.load %arg8[%c0_3, %c0_4] : memref<8x256xbf16, #tpu.memory_space<vmem>>, vector<8x128xbf16>
    tpu.vector_store %arg8[%c0_3, %c0_4], %4 {strides = array<i32>} : memref<8x256xbf16, #tpu.memory_space<vmem>>, vector<8x128xbf16>,
    %6 = math.cos %2 : vector<8x128xf32>
    %7 = arith.truncf %6 : vector<8x128xf32> to vector<8x128xbf16>
    %c0_5 = arith.constant 0 : index
    %c128 = arith.constant 128 : index
    %8 = vector.load %arg8[%c0_5, %c128] : memref<8x256xbf16, #tpu.memory_space<vmem>>, vector<8x128xbf16>
    tpu.vector_store %arg8[%c0_5, %c128], %7 {strides = array<i32>} : memref<8x256xbf16, #tpu.memory_space<vmem>>, vector<8x128xbf16>,
    %c0_6 = arith.constant 0 : index
    %c0_7 = arith.constant 0 : index
    %9 = vector.load %arg8[%c0_6, %c0_7] : memref<8x256xbf16, #tpu.memory_space<vmem>>, vector<8x256xbf16>
    %c0_8 = arith.constant 0 : index
    %c0_9 = arith.constant 0 : index
    %10 = vector.load %arg4[%c0_8, %c0_9] : memref<256x128xbf16, #tpu.memory_space<vmem>>, vector<256x128xbf16>
    %cst_10 = arith.constant dense<0.000000e+00> : vector<8x128xf32>
    %11 = tpu.matmul %9, %10, %cst_10 {dimension_numbers = #tpu.dot_dimension_numbers<[1], [0], [0], [1], [0, 0, 1, 1], [], []>} : vector<8x256xbf16>, vector<256x128xbf16>, vector<8x128xf32> -> vector<8x128xf32>
    %c0_11 = arith.constant 0 : index
    %c0_12 = arith.constant 0 : index
    %12 = vector.load %arg2[%c0_11, %c0_12] : memref<8x256xbf16, #tpu.memory_space<vmem>>, vector<8x256xbf16>
    %c0_13 = arith.constant 0 : index
    %c0_14 = arith.constant 0 : index
    %13 = vector.load %arg5[%c0_13, %c0_14] : memref<256x128xbf16, #tpu.memory_space<vmem>>, vector<256x128xbf16>
    %cst_15 = arith.constant dense<0.000000e+00> : vector<8x128xf32>
    %14 = tpu.matmul %12, %13, %cst_15 {dimension_numbers = #tpu.dot_dimension_numbers<[1], [0], [0], [1], [0, 0, 1, 1], [], []>} : vector<8x256xbf16>, vector<256x128xbf16>, vector<8x128xf32> -> vector<8x128xf32>
    %15 = arith.addf %11, %14 : vector<8x128xf32>
    %c0_16 = arith.constant 0 : index
    %c0_17 = arith.constant 0 : index
    %16 = vector.load %arg6[%c0_16, %c0_17] : memref<1x128xf32, #tpu.memory_space<vmem>>, vector<1x128xf32>
    %17 = vector.broadcast %16 : vector<1x128xf32> to vector<8x128xf32>
    %18 = arith.addf %15, %17 : vector<8x128xf32>
    %cst_18 = arith.constant 0.000000e+00 : f32
    %19 = vector.broadcast %cst_18 : f32 to vector<8x128xf32>
    %20 = arith.maximumf %18, %19 : vector<8x128xf32>
    %21 = arith.truncf %20 : vector<8x128xf32> to vector<8x128xbf16>
    %c0_19 = arith.constant 0 : index
    %c0_20 = arith.constant 0 : index
    %22 = vector.load %arg7[%c0_19, %c0_20] : memref<8x128xbf16, #tpu.memory_space<vmem>>, vector<8x128xbf16>
    tpu.vector_store %arg7[%c0_19, %c0_20], %21 {strides = array<i32>} : memref<8x128xbf16, #tpu.memory_space<vmem>>, vector<8x128xbf16>,
    return
  }
  func.func @transform_0(%arg0: i32) -> (i32, i32) {
    %c0_i32 = arith.constant 0 : i32
    %c0_i32_0 = arith.constant 0 : i32
    return %arg0, %c0_i32 : i32, i32
  }
  func.func @transform_1(%arg0: i32) -> (i32, i32) {
    %c0_i32 = arith.constant 0 : i32
    %c0_i32_0 = arith.constant 0 : i32
    return %arg0, %c0_i32 : i32, i32
  }
  func.func @transform_2(%arg0: i32) -> (i32, i32) {
    %c0_i32 = arith.constant 0 : i32
    %c0_i32_0 = arith.constant 0 : i32
    %c0_i32_1 = arith.constant 0 : i32
    return %c0_i32, %c0_i32_0 : i32, i32
  }
  func.func @transform_3(%arg0: i32) -> (i32, i32) {
    %c0_i32 = arith.constant 0 : i32
    %c0_i32_0 = arith.constant 0 : i32
    %c0_i32_1 = arith.constant 0 : i32
    return %c0_i32, %c0_i32_0 : i32, i32
  }
  func.func @transform_4(%arg0: i32) -> (i32, i32) {
    %c0_i32 = arith.constant 0 : i32
    %c0_i32_0 = arith.constant 0 : i32
    %c0_i32_1 = arith.constant 0 : i32
    return %c0_i32, %c0_i32_0 : i32, i32
  }
  func.func @transform_5(%arg0: i32) -> (i32, i32) {
    %c0_i32 = arith.constant 0 : i32
    %c0_i32_0 = arith.constant 0 : i32
    %c0_i32_1 = arith.constant 0 : i32
    return %c0_i32, %c0_i32_0 : i32, i32
  }
  func.func @transform_6(%arg0: i32) -> (i32, i32) {
    %c0_i32 = arith.constant 0 : i32
    %c0_i32_0 = arith.constant 0 : i32
    return %arg0, %c0_i32 : i32, i32
  }
}

module attributes {stable_mosaic.version = 11 : i64} {
  func.func @kernel(%arg0: i32, %arg1: memref<8x8xf32, #tpu.memory_space<vmem>>, %arg2: memref<8x256xbf16, #tpu.memory_space<vmem>>, %arg3: memref<8x128xf32, #tpu.memory_space<vmem>>, %arg4: memref<256x128xbf16, #tpu.memory_space<vmem>>, %arg5: memref<256x128xbf16, #tpu.memory_space<vmem>>, %arg6: memref<1x128xf32, #tpu.memory_space<vmem>>, %arg7: memref<8x128xbf16, #tpu.memory_space<vmem>>, %arg8: memref<8x256xbf16, #tpu.memory_space<vmem>>) attributes {dimension_semantics = [#tpu.dimension_semantics<parallel>], iteration_bounds = array<i64: 2>, scalar_prefetch = 0 : i64, scratch_operands = 1 : i64, tpu.core_type = #tpu.core_type<tc>, window_params = [{transform_indices = @transform_0, window_bounds = array<i64: 8, 8>}, {transform_indices = @transform_1, window_bounds = array<i64: 8, 256>}, {pipeline_mode = #tpu.pipeline_mode<synchronous>, transform_indices = @transform_2, window_bounds = array<i64: 8, 128>}, {pipeline_mode = #tpu.pipeline_mode<synchronous>, transform_indices = @transform_3, window_bounds = array<i64: 256, 128>}, {pipeline_mode = #tpu.pipeline_mode<synchronous>, transform_indices = @transform_4, window_bounds = array<i64: 256, 128>}, {pipeline_mode = #tpu.pipeline_mode<synchronous>, transform_indices = @transform_5, window_bounds = array<i64: 1, 128>}, {transform_indices = @transform_6, window_bounds = array<i64: 8, 128>}]} {
    %c0 = arith.constant 0 : index
    %c0_0 = arith.constant 0 : index
    %0 = vector.load %arg1[%c0, %c0_0] : memref<8x8xf32, #tpu.memory_space<vmem>>, vector<8x8xf32>
    %c0_1 = arith.constant 0 : index
    %c0_2 = arith.constant 0 : index
    %1 = vector.load %arg3[%c0_1, %c0_2] : memref<8x128xf32, #tpu.memory_space<vmem>>, vector<8x128xf32>
    %cst = arith.constant dense<0.000000e+00> : vector<8x128xf32>
    %2 = tpu.matmul %0, %1, %cst {dimension_numbers = #tpu.dot_dimension_numbers<[1], [0], [0], [1], [0, 0, 1, 1], [], []>} : vector<8x8xf32>, vector<8x128xf32>, vector<8x128xf32> -> vector<8x128xf32>
    %3 = math.sin %2 : vector<8x128xf32>
    %4 = arith.truncf %3 : vector<8x128xf32> to vector<8x128xbf16>
    %c0_3 = arith.constant 0 : index
    %c0_4 = arith.constant 0 : index
    %5 = vector.load %arg8[%c0_3, %c0_4] : memref<8x256xbf16, #tpu.memory_space<vmem>>, vector<8x128xbf16>
    tpu.vector_store %arg8[%c0_3, %c0_4], %4 {strides = array<i32>} : memref<8x256xbf16, #tpu.memory_space<vmem>>, vector<8x128xbf16>,
    %6 = math.cos %2 : vector<8x128xf32>
    %7 = arith.truncf %6 : vector<8x128xf32> to vector<8x128xbf16>
    %c0_5 = arith.constant 0 : index
    %c128 = arith.constant 128 : index
    %8 = vector.load %arg8[%c0_5, %c128] : memref<8x256xbf16, #tpu.memory_space<vmem>>, vector<8x128xbf16>
    tpu.vector_store %arg8[%c0_5, %c128], %7 {strides = array<i32>} : memref<8x256xbf16, #tpu.memory_space<vmem>>, vector<8x128xbf16>,
    %c0_6 = arith.constant 0 : index
    %c0_7 = arith.constant 0 : index
    %9 = vector.load %arg8[%c0_6, %c0_7] : memref<8x256xbf16, #tpu.memory_space<vmem>>, vector<8x256xbf16>
    %c0_8 = arith.constant 0 : index
    %c0_9 = arith.constant 0 : index
    %10 = vector.load %arg4[%c0_8, %c0_9] : memref<256x128xbf16, #tpu.memory_space<vmem>>, vector<256x128xbf16>
    %cst_10 = arith.constant dense<0.000000e+00> : vector<8x128xf32>
    %11 = tpu.matmul %9, %10, %cst_10 {dimension_numbers = #tpu.dot_dimension_numbers<[1], [0], [0], [1], [0, 0, 1, 1], [], []>} : vector<8x256xbf16>, vector<256x128xbf16>, vector<8x128xf32> -> vector<8x128xf32>
    %c0_11 = arith.constant 0 : index
    %c0_12 = arith.constant 0 : index
    %12 = vector.load %arg2[%c0_11, %c0_12] : memref<8x256xbf16, #tpu.memory_space<vmem>>, vector<8x256xbf16>
    %c0_13 = arith.constant 0 : index
    %c0_14 = arith.constant 0 : index
    %13 = vector.load %arg5[%c0_13, %c0_14] : memref<256x128xbf16, #tpu.memory_space<vmem>>, vector<256x128xbf16>
    %cst_15 = arith.constant dense<0.000000e+00> : vector<8x128xf32>
    %14 = tpu.matmul %12, %13, %cst_15 {dimension_numbers = #tpu.dot_dimension_numbers<[1], [0], [0], [1], [0, 0, 1, 1], [], []>} : vector<8x256xbf16>, vector<256x128xbf16>, vector<8x128xf32> -> vector<8x128xf32>
    %15 = arith.addf %11, %14 : vector<8x128xf32>
    %c0_16 = arith.constant 0 : index
    %c0_17 = arith.constant 0 : index
    %16 = vector.load %arg6[%c0_16, %c0_17] : memref<1x128xf32, #tpu.memory_space<vmem>>, vector<1x128xf32>
    %17 = vector.broadcast %16 : vector<1x128xf32> to vector<8x128xf32>
    %18 = arith.addf %15, %17 : vector<8x128xf32>
    %cst_18 = arith.constant 0.000000e+00 : f32
    %19 = vector.broadcast %cst_18 : f32 to vector<8x128xf32>
    %20 = arith.maximumf %18, %19 : vector<8x128xf32>
    %21 = arith.truncf %20 : vector<8x128xf32> to vector<8x128xbf16>
    %c0_19 = arith.constant 0 : index
    %c0_20 = arith.constant 0 : index
    %22 = vector.load %arg7[%c0_19, %c0_20] : memref<8x128xbf16, #tpu.memory_space<vmem>>, vector<8x128xbf16>
    tpu.vector_store %arg7[%c0_19, %c0_20], %21 {strides = array<i32>} : memref<8x128xbf16, #tpu.memory_space<vmem>>, vector<8x128xbf16>,
    return
  }
  func.func @transform_0(%arg0: i32) -> (i32, i32) {
    %c0_i32 = arith.constant 0 : i32
    %c0_i32_0 = arith.constant 0 : i32
    return %arg0, %c0_i32 : i32, i32
  }
  func.func @transform_1(%arg0: i32) -> (i32, i32) {
    %c0_i32 = arith.constant 0 : i32
    %c0_i32_0 = arith.constant 0 : i32
    return %arg0, %c0_i32 : i32, i32
  }
  func.func @transform_2(%arg0: i32) -> (i32, i32) {
    %c0_i32 = arith.constant 0 : i32
    %c0_i32_0 = arith.constant 0 : i32
    %c0_i32_1 = arith.constant 0 : i32
    return %c0_i32, %c0_i32_0 : i32, i32
  }
  func.func @transform_3(%arg0: i32) -> (i32, i32) {
    %c0_i32 = arith.constant 0 : i32
    %c0_i32_0 = arith.constant 0 : i32
    %c0_i32_1 = arith.constant 0 : i32
    return %c0_i32, %c0_i32_0 : i32, i32
  }
  func.func @transform_4(%arg0: i32) -> (i32, i32) {
    %c0_i32 = arith.constant 0 : i32
    %c0_i32_0 = arith.constant 0 : i32
    %c0_i32_1 = arith.constant 0 : i32
    return %c0_i32, %c0_i32_0 : i32, i32
  }
  func.func @transform_5(%arg0: i32) -> (i32, i32) {
    %c0_i32 = arith.constant 0 : i32
    %c0_i32_0 = arith.constant 0 : i32
    %c0_i32_1 = arith.constant 0 : i32
    return %c0_i32, %c0_i32_0 : i32, i32
  }
  func.func @transform_6(%arg0: i32) -> (i32, i32) {
    %c0_i32 = arith.constant 0 : i32
    %c0_i32_0 = arith.constant 0 : i32
    return %arg0, %c0_i32 : i32, i32
  }
}

</mosaic_0001>

<llo_original>
// kernel: fast_rcnn_forward.1
$region0: #{fast_rcnn_forward.1}
  #allocation0 [shape = 'u32[]', space=smem, size = 0x4, offset = 0x4, fixed_abs, tag = 'smem constant byte address 0x4 - core index']
  #allocation1 [shape = 'u32[144,128]{1,0:T(1,128)}', space=vmem, size = 0x12000, scoped, tag = 'internal scratch']
  #allocation2 [shape = 'bf16[8,256]{1,0:T(8,128)(2,1)}', space=vmem, size = 0x1000, scoped, tag = 'scratch operand']
  %s0 = inlined_call_operand.vmem [shape: f32[16,8], index: 0, kind: input, shape index: {}]
  %s1 = inlined_call_operand.vmem [shape: bf16[16,256], index: 1, kind: input, shape index: {}]
  %s2 = inlined_call_operand.vmem [shape: f32[8,128], index: 2, kind: input, shape index: {}]
  %s3 = inlined_call_operand.vmem [shape: bf16[256,128], index: 3, kind: input, shape index: {}]
  %s4 = inlined_call_operand.vmem [shape: bf16[256,128], index: 4, kind: input, shape index: {}]
  %s5 = inlined_call_operand.vmem [shape: f32[1,128], index: 5, kind: input, shape index: {}]
  %s6 = inlined_call_operand.vmem [shape: bf16[16,128], index: 6, kind: output, shape index: {}]
  %s7 = sld [smem:[#allocation0]]
  $region57: #{fast_rcnn_forward.1} parent=0
    _
  %s9 = ssub.s32 1, %s7
  %s10 = scalar_select 0, %s9, %s7
  loop: start=0, step=1, limit=4
  $region2: #{fast_rcnn_forward.1} parent=0 // loop_pre_header
    _
  $region3: #{fast_rcnn_forward.1} parent=0 // loop_header
    %s12 = sphi 0, %s16
    %p13 = scmp.ge.s32.totalorder %s12, 4
    %s22 = sphi 0, %s24
    %s25 = sphi 0, %s22
    %s26 = sphi 0, %s25
    %s42 = sphi 0, %s26
    %s48 = sphi 0, %s50
    %s51 = sphi 0, %s48
    %s52 = sphi 0, %s51
    %s68 = sphi 0, %s52
    %s72 = sphi 0, %s72
    %s74 = sphi 0, %s72
    %s75 = sphi 0, %s74
    %s89 = sphi 0, %s75
    %s93 = sphi 0, %s93
    %s95 = sphi 0, %s93
    %s96 = sphi 0, %s95
    %s110 = sphi 0, %s96
    %s114 = sphi 0, %s114
    %s116 = sphi 0, %s114
    %s117 = sphi 0, %s116
    %s131 = sphi 0, %s117
    %s135 = sphi 0, %s135
    %s137 = sphi 0, %s135
    %s138 = sphi 0, %s137
    %s152 = sphi 0, %s138
    %s158 = sphi 0, %s160
    %s161 = sphi 0, %s158
    %s162 = sphi 0, %s161
    %s178 = sphi 0, %s162
  $region4: #{fast_rcnn_forward.1} parent=0 // loop_header_branch
    %15 = sbr.rel (%p13) target = $region8
  $region5: #{fast_rcnn_forward.1} parent=0 // loop_body
    %s17 = ssub.s32 %s12, 1
    %s18 = ssub.s32 %s12, 2
    %s19 = sadd.s32 %s12, 1
    %s20 = ssub.s32 %s12, %s19
    %p21 = scmp.eq.s32.totalorder %s20, 0
    %s23 = sadd.s32 %s22, 1
    %s24 = scalar_select %p21, %s22, %s23
    %p27 = pneg %p21
    %p28 = scmp.eq.s32.totalorder %s12, 1
    %p29 = por %p27, %p28
    %p30 = scmp.ne.s32.totalorder %s22, %s25
    %p31 = scmp.eq.s32.totalorder %s12, 0
    %p32 = por %p30, %p31
    %p33 = scmp.ne.s32.totalorder %s22, %s25
    %p34 = scmp.eq.s32.totalorder %s17, 1
    %p35 = por %p33, %p34
    %p36 = scmp.ne.s32.totalorder %s25, %s26
    %p37 = scmp.eq.s32.totalorder %s17, 0
    %p38 = por %p36, %p37
    %p39 = scmp.ne.s32.totalorder %s25, %s26
    %p40 = scmp.eq.s32.totalorder %s18, 1
    %p41 = por %p39, %p40
    %p43 = scmp.ne.s32.totalorder %s26, %s42
    %p44 = scmp.eq.s32.totalorder %s18, 0
    %p45 = por %p43, %p44
    %s46 = ssub.s32 %s12, %s19
    %p47 = scmp.eq.s32.totalorder %s46, 0
    %s49 = sadd.s32 %s48, 1
    %s50 = scalar_select %p47, %s48, %s49
    %p53 = pneg %p47
    %p54 = scmp.eq.s32.totalorder %s12, 1
    %p55 = por %p53, %p54
    %p56 = scmp.ne.s32.totalorder %s48, %s51
    %p57 = scmp.eq.s32.totalorder %s12, 0
    %p58 = por %p56, %p57
    %p59 = scmp.ne.s32.totalorder %s48, %s51
    %p60 = scmp.eq.s32.totalorder %s17, 1
    %p61 = por %p59, %p60
    %p62 = scmp.ne.s32.totalorder %s51, %s52
    %p63 = scmp.eq.s32.totalorder %s17, 0
    %p64 = por %p62, %p63
    %p65 = scmp.ne.s32.totalorder %s51, %s52
    %p66 = scmp.eq.s32.totalorder %s18, 1
    %p67 = por %p65, %p66
    %p69 = scmp.ne.s32.totalorder %s52, %s68
    %p70 = scmp.eq.s32.totalorder %s18, 0
    %p71 = por %p69, %p70
    %s73 = sadd.s32 %s72, 1
    %p76 = scmp.eq.s32.totalorder %s12, 1
    %p77 = scmp.ne.s32.totalorder %s72, %s74
    %p78 = scmp.eq.s32.totalorder %s12, 0
    %p79 = por %p77, %p78
    %p80 = scmp.ne.s32.totalorder %s72, %s74
    %p81 = scmp.eq.s32.totalorder %s17, 1
    %p82 = por %p80, %p81
    %p83 = scmp.ne.s32.totalorder %s74, %s75
    %p84 = scmp.eq.s32.totalorder %s17, 0
    %p85 = por %p83, %p84
    %p86 = scmp.ne.s32.totalorder %s74, %s75
    %p87 = scmp.eq.s32.totalorder %s18, 1
    %p88 = por %p86, %p87
    %p90 = scmp.ne.s32.totalorder %s75, %s89
    %p91 = scmp.eq.s32.totalorder %s18, 0
    %p92 = por %p90, %p91
    %s94 = sadd.s32 %s93, 1
    %p97 = scmp.eq.s32.totalorder %s12, 1
    %p98 = scmp.ne.s32.totalorder %s93, %s95
    %p99 = scmp.eq.s32.totalorder %s12, 0
    %p100 = por %p98, %p99
    %p101 = scmp.ne.s32.totalorder %s93, %s95
    %p102 = scmp.eq.s32.totalorder %s17, 1
    %p103 = por %p101, %p102
    %p104 = scmp.ne.s32.totalorder %s95, %s96
    %p105 = scmp.eq.s32.totalorder %s17, 0
    %p106 = por %p104, %p105
    %p107 = scmp.ne.s32.totalorder %s95, %s96
    %p108 = scmp.eq.s32.totalorder %s18, 1
    %p109 = por %p107, %p108
    %p111 = scmp.ne.s32.totalorder %s96, %s110
    %p112 = scmp.eq.s32.totalorder %s18, 0
    %p113 = por %p111, %p112
    %s115 = sadd.s32 %s114, 1
    %p118 = scmp.eq.s32.totalorder %s12, 1
    %p119 = scmp.ne.s32.totalorder %s114, %s116
    %p120 = scmp.eq.s32.totalorder %s12, 0
    %p121 = por %p119, %p120
    %p122 = scmp.ne.s32.totalorder %s114, %s116
    %p123 = scmp.eq.s32.totalorder %s17, 1
    %p124 = por %p122, %p123
    %p125 = scmp.ne.s32.totalorder %s116, %s117
    %p126 = scmp.eq.s32.totalorder %s17, 0
    %p127 = por %p125, %p126
    %p128 = scmp.ne.s32.totalorder %s116, %s117
    %p129 = scmp.eq.s32.totalorder %s18, 1
    %p130 = por %p128, %p129
    %p132 = scmp.ne.s32.totalorder %s117, %s131
    %p133 = scmp.eq.s32.totalorder %s18, 0
    %p134 = por %p132, %p133
    %s136 = sadd.s32 %s135, 1
    %p139 = scmp.eq.s32.totalorder %s12, 1
    %p140 = scmp.ne.s32.totalorder %s135, %s137
    %p141 = scmp.eq.s32.totalorder %s12, 0
    %p142 = por %p140, %p141
    %p143 = scmp.ne.s32.totalorder %s135, %s137
    %p144 = scmp.eq.s32.totalorder %s17, 1
    %p145 = por %p143, %p144
    %p146 = scmp.ne.s32.totalorder %s137, %s138
    %p147 = scmp.eq.s32.totalorder %s17, 0
    %p148 = por %p146, %p147
    %p149 = scmp.ne.s32.totalorder %s137, %s138
    %p150 = scmp.eq.s32.totalorder %s18, 1
    %p151 = por %p149, %p150
    %p153 = scmp.ne.s32.totalorder %s138, %s152
    %p154 = scmp.eq.s32.totalorder %s18, 0
    %p155 = por %p153, %p154
    %s156 = ssub.s32 %s12, %s19
    %p157 = scmp.eq.s32.totalorder %s156, 0
    %s159 = sadd.s32 %s158, 1
    %s160 = scalar_select %p157, %s158, %s159
    %p163 = pneg %p157
    %p164 = scmp.eq.s32.totalorder %s12, 1
    %p165 = por %p163, %p164
    %p166 = scmp.ne.s32.totalorder %s158, %s161
    %p167 = scmp.eq.s32.totalorder %s12, 0
    %p168 = por %p166, %p167
    %p169 = scmp.ne.s32.totalorder %s158, %s161
    %p170 = scmp.eq.s32.totalorder %s17, 1
    %p171 = por %p169, %p170
    %p172 = scmp.ne.s32.totalorder %s161, %s162
    %p173 = scmp.eq.s32.totalorder %s17, 0
    %p174 = por %p172, %p173
    %p175 = scmp.ne.s32.totalorder %s161, %s162
    %p176 = scmp.eq.s32.totalorder %s18, 1
    %p177 = por %p175, %p176
    %p179 = scmp.ne.s32.totalorder %s162, %s178
    %p180 = scmp.eq.s32.totalorder %s18, 0
    %p181 = por %p179, %p180
    %p182 = scmp.le.s32.totalorder 1, %s12
    %p183 = scmp.lt.s32.totalorder %s12, 3
    %p184 = pnand %p182, %p183
    %p185 = pneg %p184
    // Predicated region
    $region9: #{fast_rcnn_forward.1} parent=5 // pred_check
      _
    $region10: #{fast_rcnn_forward.1} parent=5 // pred_check_branch
      %187 = sbr.rel (%p184) target = $region12
    $region11: #{fast_rcnn_forward.1} parent=5 // pred_region
      %s188 = ssub.s32 %s12, 1
      // Predicated region
      $region13: #{fast_rcnn_forward.1} parent=11 // pred_check
        %p189 = pneg %p85
      $region14: #{fast_rcnn_forward.1} parent=11 // pred_check_branch
        %191 = sbr.rel (%p189) target = $region16
      $region15: #{fast_rcnn_forward.1} parent=11 // pred_region
        _
      $region16: #{fast_rcnn_forward.1} parent=11 // pred_fallthru
        _
      // Predicated region
      $region17: #{fast_rcnn_forward.1} parent=11 // pred_check
        %p192 = pneg %p106
      $region18: #{fast_rcnn_forward.1} parent=11 // pred_check_branch
        %194 = sbr.rel (%p192) target = $region20
      $region19: #{fast_rcnn_forward.1} parent=11 // pred_region
        _
      $region20: #{fast_rcnn_forward.1} parent=11 // pred_fallthru
        _
      // Predicated region
      $region21: #{fast_rcnn_forward.1} parent=11 // pred_check
        %p195 = pneg %p127
      $region22: #{fast_rcnn_forward.1} parent=11 // pred_check_branch
        %197 = sbr.rel (%p195) target = $region24
      $region23: #{fast_rcnn_forward.1} parent=11 // pred_region
        _
      $region24: #{fast_rcnn_forward.1} parent=11 // pred_fallthru
        _
      // Predicated region
      $region25: #{fast_rcnn_forward.1} parent=11 // pred_check
        %p198 = pneg %p148
      $region26: #{fast_rcnn_forward.1} parent=11 // pred_check_branch
        %200 = sbr.rel (%p198) target = $region28
      $region27: #{fast_rcnn_forward.1} parent=11 // pred_region
        _
      $region28: #{fast_rcnn_forward.1} parent=11 // pred_fallthru
        _
    $region12: #{fast_rcnn_forward.1} parent=5 // pred_fallthru
      _
    %p201 = scmp.lt.s32.totalorder %s12, 2
    // Predicated region
    $region29: #{fast_rcnn_forward.1} parent=5 // pred_check
      %p202 = pneg %p201
    $region30: #{fast_rcnn_forward.1} parent=5 // pred_check_branch
      %204 = sbr.rel (%p202) target = $region32
    $region31: #{fast_rcnn_forward.1} parent=5 // pred_region
      // Predicated region
      $region33: #{fast_rcnn_forward.1} parent=31 // pred_check
        %p205 = pneg %p32
      $region34: #{fast_rcnn_forward.1} parent=31 // pred_check_branch
        %207 = sbr.rel (%p205) target = $region36
      $region35: #{fast_rcnn_forward.1} parent=31 // pred_region
        %p208 = scmp.lt.s32.totalorder %s12, 1
        %s209 = scalar_select %p208, %s12, 1
        %s210 = smul.addr %s209, 8
        %s211 = scalar_lea.vmem %s0, %s210
      $region36: #{fast_rcnn_forward.1} parent=31 // pred_fallthru
        _
      // Predicated region
      $region37: #{fast_rcnn_forward.1} parent=31 // pred_check
        %p212 = pneg %p58
      $region38: #{fast_rcnn_forward.1} parent=31 // pred_check_branch
        %214 = sbr.rel (%p212) target = $region40
      $region39: #{fast_rcnn_forward.1} parent=31 // pred_region
        %p215 = scmp.lt.s32.totalorder %s12, 1
        %s216 = scalar_select %p215, %s12, 1
        %s217 = smul.addr %s216, 2
        %s218 = smul.addr %s217, 4
        %s219 = scalar_lea.vmem %s1, %s218
      $region40: #{fast_rcnn_forward.1} parent=31 // pred_fallthru
        _
    $region32: #{fast_rcnn_forward.1} parent=5 // pred_fallthru
      _
    %p220 = scmp.le.s32.totalorder 1, %s12
    %p221 = scmp.lt.s32.totalorder %s12, 3
    %p222 = pnand %p220, %p221
    %p223 = pneg %p222
    // Predicated region
    $region41: #{fast_rcnn_forward.1} parent=5 // pred_check
      _
    $region42: #{fast_rcnn_forward.1} parent=5 // pred_check_branch
      %225 = sbr.rel (%p222) target = $region44
    $region43: #{fast_rcnn_forward.1} parent=5 // pred_region
      %s226 = ssub.s32 %s12, 1
      %p227 = scmp.lt.s32.totalorder %s17, 1
      %s228 = scalar_select %p227, %s17, 1
      %s229 = smul.addr %s228, 8
      %s230 = scalar_lea.vmem %s0, %s229
      %p231 = pneg %p38
      %p232 = pneg %p35
      %p233 = scmp.lt.s32.totalorder %s17, 1
      %s234 = scalar_select %p233, %s17, 1
      %s235 = smul.addr %s234, 2
      %s236 = smul.addr %s235, 4
      %s237 = scalar_lea.vmem %s1, %s236
      %p238 = pneg %p64
      %p239 = pneg %p61
      %p240 = pneg %p85
      %p241 = pneg %p82
      %p242 = pneg %p106
      %p243 = pneg %p103
      %p244 = pneg %p127
      %p245 = pneg %p124
      %p246 = pneg %p148
      %p247 = pneg %p145
      %p248 = pneg %p174
      %p249 = pneg %p171
      %p250 = scmp.lt.s32.totalorder %s17, 1
      %s251 = scalar_select %p250, %s17, 1
      %s252 = smul.addr %s251, 4
      %s253 = scalar_lea.vmem %s6, %s252
      %p254 = scmp.lt.s32.totalorder %s17, 1
      %s255 = scalar_select %p254, %s17, 1
      %s256 = smul.addr %s255, 8
      %s257 = scalar_lea.vmem %s0, %s256
      %p258 = scmp.lt.s32.totalorder %s17, 1
      %s259 = scalar_select %p258, %s17, 1
      %s260 = smul.addr %s259, 2
      %s261 = smul.addr %s260, 4
      %s262 = scalar_lea.vmem %s1, %s261
      %p263 = scmp.lt.s32.totalorder %s17, 1
      %s264 = scalar_select %p263, %s17, 1
      %s265 = smul.addr %s264, 4
      %s266 = scalar_lea.vmem %s6, %s265
      %v268 = vld [vmem:[%s257] sm:$0xff]
      %v269 = vld [vmem:[%s2] sm:$0xff]
      %vm270 = vcmask 64512
      %v272 = vsel %vm270, %v268, 0
      %274 = vmatprep.subr.mxu0 0.0
      %v275 = vand.u32 %v269, 4294901760
      %276 = vmatpush1.msra.mxu0 %v275
      %277 = vmatprep.subr.mxu0 0.0
      %278 = vmatpush1.msra.mxu0 0.0
      %279 = vmatprep.subr.mxu0 0.0
      %280 = vmatpush1.msra.mxu0 0.0
      %281 = vmatprep.subr.mxu0 0.0
      %282 = vmatpush1.msra.mxu0 0.0
      %283 = vmatprep.subr.mxu0 0.0
      %284 = vmatpush1.msra.mxu0 0.0
      %285 = vmatprep.subr.mxu0 0.0
      %286 = vmatpush1.msra.mxu0 0.0
      %287 = vmatprep.subr.mxu0 0.0
      %288 = vmatpush1.msra.mxu0 0.0
      %289 = vmatprep.subr.mxu0 0.0
      %290 = vmatpush1.msra.mxu0 0.0
      %291 = vmatprep.subr.mxu0 0.0
      %292 = vmatpush1.msra.mxu0 0.0
      %293 = vmatprep.subr.mxu0 0.0
      %294 = vmatpush1.msra.mxu0 0.0
      %295 = vmatprep.subr.mxu0 0.0
      %296 = vmatpush1.msra.mxu0 0.0
      %297 = vmatprep.subr.mxu0 0.0
      %298 = vmatpush1.msra.mxu0 0.0
      %299 = vmatprep.subr.mxu0 0.0
      %300 = vmatpush1.msra.mxu0 0.0
      %301 = vmatprep.subr.mxu0 0.0
      %302 = vmatpush1.msra.mxu0 0.0
      %303 = vmatprep.subr.mxu0 0.0
      %304 = vmatpush1.msra.mxu0 0.0
      %305 = vmatprep.subr.mxu0 0.0
      %306 = vmatpush1.msra.mxu0 0.0
      %307 = vmatprep.subr.mxu0 0.0
      %308 = vmatpush1.msra.mxu0 0.0
      %309 = vmatprep.subr.mxu0 0.0
      %310 = vmatpush1.msra.mxu0 0.0
      %311 = vmatprep.subr.mxu0 0.0
      %312 = vmatpush1.msra.mxu0 0.0
      %313 = vmatprep.subr.mxu0 0.0
      %314 = vmatpush1.msra.mxu0 0.0
      %315 = vmatprep.subr.mxu0 0.0
      %316 = vmatpush1.msra.mxu0 0.0
      %317 = vmatprep.subr.mxu0 0.0
      %318 = vmatpush1.msra.mxu0 0.0
      %319 = vmatprep.subr.mxu0 0.0
      %320 = vmatpush1.msra.mxu0 0.0
      %321 = vmatprep.subr.mxu0 0.0
      %322 = vmatpush1.msra.mxu0 0.0
      %323 = vmatprep.subr.mxu0 0.0
      %324 = vmatpush1.msra.mxu0 0.0
      %325 = vmatprep.subr.mxu0 0.0
      %326 = vmatpush1.msra.mxu0 0.0
      %327 = vmatprep.subr.mxu0 0.0
      %328 = vmatpush1.msra.mxu0 0.0
      %329 = vmatprep.subr.mxu0 0.0
      %330 = vmatpush1.msra.mxu0 0.0
      %331 = vmatprep.subr.mxu0 0.0
      %332 = vmatpush1.msra.mxu0 0.0
      %333 = vmatprep.subr.mxu0 0.0
      %334 = vmatpush1.msra.mxu0 0.0
      %335 = vmatprep.subr.mxu0 0.0
      %336 = vmatpush1.msra.mxu0 0.0
      %337 = vmatprep.subr.mxu0 0.0
      %338 = vmatpush1.msra.mxu0 0.0
      %339 = vmatprep.mubr.f32.mxu0 0.0
      %v340 = vand.u32 %v272, 4294901760
      %v341 = vsub.f32 %v272, %v340
      %v342 = vand.u32 %v341, 4294901760
      %v343 = vsub.f32 %v341, %v342
      %v344 = vand.u32 %v343, 4294901760
      %345 = vmatmul.mubr.f32.gmra.mrb[0].mxu0 %v344
      %v346 = vpop.f32.mrb[0].mxu0
      %v347 = vadd.f32 0.0, %v346
      %v348 = vpop.f32.mrb[0].mxu0
      %349 = vdwg.mxu0
      %350 = vmatprep.subr.mxu0 0.0
      %v351 = vand.u32 %v269, 4294901760
      %v352 = vsub.f32 %v269, %v351
      %v353 = vand.u32 %v352, 4294901760
      %v354 = vsub.f32 %v352, %v353
      %v355 = vand.u32 %v354, 4294901760
      %356 = vmatpush1.msra.mxu0 %v355
      %357 = vmatprep.subr.mxu0 0.0
      %358 = vmatpush1.msra.mxu0 0.0
      %359 = vmatprep.subr.mxu0 0.0
      %360 = vmatpush1.msra.mxu0 0.0
      %361 = vmatprep.subr.mxu0 0.0
      %362 = vmatpush1.msra.mxu0 0.0
      %363 = vmatprep.subr.mxu0 0.0
      %364 = vmatpush1.msra.mxu0 0.0
      %365 = vmatprep.subr.mxu0 0.0
      %366 = vmatpush1.msra.mxu0 0.0
      %367 = vmatprep.subr.mxu0 0.0
      %368 = vmatpush1.msra.mxu0 0.0
      %369 = vmatprep.subr.mxu0 0.0
      %370 = vmatpush1.msra.mxu0 0.0
      %371 = vmatprep.subr.mxu0 0.0
      %372 = vmatpush1.msra.mxu0 0.0
      %373 = vmatprep.subr.mxu0 0.0
      %374 = vmatpush1.msra.mxu0 0.0
      %375 = vmatprep.subr.mxu0 0.0
      %376 = vmatpush1.msra.mxu0 0.0
      %377 = vmatprep.subr.mxu0 0.0
      %378 = vmatpush1.msra.mxu0 0.0
      %379 = vmatprep.subr.mxu0 0.0
      %380 = vmatpush1.msra.mxu0 0.0
      %381 = vmatprep.subr.mxu0 0.0
      %382 = vmatpush1.msra.mxu0 0.0
      %383 = vmatprep.subr.mxu0 0.0
      %384 = vmatpush1.msra.mxu0 0.0
      %385 = vmatprep.subr.mxu0 0.0
      %386 = vmatpush1.msra.mxu0 0.0
      %387 = vmatprep.subr.mxu0 0.0
      %388 = vmatpush1.msra.mxu0 0.0
      %389 = vmatprep.subr.mxu0 0.0
      %390 = vmatpush1.msra.mxu0 0.0
      %391 = vmatprep.subr.mxu0 0.0
      %392 = vmatpush1.msra.mxu0 0.0
      %393 = vmatprep.subr.mxu0 0.0
      %394 = vmatpush1.msra.mxu0 0.0
      %395 = vmatprep.subr.mxu0 0.0
      %396 = vmatpush1.msra.mxu0 0.0
      %397 = vmatprep.subr.mxu0 0.0
      %398 = vmatpush1.msra.mxu0 0.0
      %399 = vmatprep.subr.mxu0 0.0
      %400 = vmatpush1.msra.mxu0 0.0
      %401 = vmatprep.subr.mxu0 0.0
      %402 = vmatpush1.msra.mxu0 0.0
      %403 = vmatprep.subr.mxu0 0.0
      %404 = vmatpush1.msra.mxu0 0.0
      %405 = vmatprep.subr.mxu0 0.0
      %406 = vmatpush1.msra.mxu0 0.0
      %407 = vmatprep.subr.mxu0 0.0
      %408 = vmatpush1.msra.mxu0 0.0
      %409 = vmatprep.subr.mxu0 0.0
      %410 = vmatpush1.msra.mxu0 0.0
      %411 = vmatprep.subr.mxu0 0.0
      %412 = vmatpush1.msra.mxu0 0.0
      %413 = vmatprep.subr.mxu0 0.0
      %414 = vmatpush1.msra.mxu0 0.0
      %415 = vmatprep.subr.mxu0 0.0
      %416 = vmatpush1.msra.mxu0 0.0
      %417 = vmatprep.subr.mxu0 0.0
      %418 = vmatpush1.msra.mxu0 0.0
      %419 = vmatprep.mubr.f32.mxu0 0.0
      %v420 = vand.u32 %v272, 4294901760
      %421 = vmatmul.mubr.f32.gmra.mrb[0].mxu0 %v420
      %v422 = vpop.f32.mrb[0].mxu0
      %v423 = vadd.f32 %v347, %v422
      %v424 = vpop.f32.mrb[0].mxu0
      %425 = vdwg.mxu0
      %426 = vmatprep.subr.mxu0 0.0
      %v427 = vand.u32 %v269, 4294901760
      %v428 = vsub.f32 %v269, %v427
      %429 = vmatpush1.msra.mxu0 %v428
      %430 = vmatprep.subr.mxu0 0.0
      %431 = vmatpush1.msra.mxu0 0.0
      %432 = vmatprep.subr.mxu0 0.0
      %433 = vmatpush1.msra.mxu0 0.0
      %434 = vmatprep.subr.mxu0 0.0
      %435 = vmatpush1.msra.mxu0 0.0
      %436 = vmatprep.subr.mxu0 0.0
      %437 = vmatpush1.msra.mxu0 0.0
      %438 = vmatprep.subr.mxu0 0.0
      %439 = vmatpush1.msra.mxu0 0.0
      %440 = vmatprep.subr.mxu0 0.0
      %441 = vmatpush1.msra.mxu0 0.0
      %442 = vmatprep.subr.mxu0 0.0
      %443 = vmatpush1.msra.mxu0 0.0
      %444 = vmatprep.subr.mxu0 0.0
      %445 = vmatpush1.msra.mxu0 0.0
      %446 = vmatprep.subr.mxu0 0.0
      %447 = vmatpush1.msra.mxu0 0.0
      %448 = vmatprep.subr.mxu0 0.0
      %449 = vmatpush1.msra.mxu0 0.0
      %450 = vmatprep.subr.mxu0 0.0
      %451 = vmatpush1.msra.mxu0 0.0
      %452 = vmatprep.subr.mxu0 0.0
      %453 = vmatpush1.msra.mxu0 0.0
      %454 = vmatprep.subr.mxu0 0.0
      %455 = vmatpush1.msra.mxu0 0.0
      %456 = vmatprep.subr.mxu0 0.0
      %457 = vmatpush1.msra.mxu0 0.0
      %458 = vmatprep.subr.mxu0 0.0
      %459 = vmatpush1.msra.mxu0 0.0
      %460 = vmatprep.subr.mxu0 0.0
      %461 = vmatpush1.msra.mxu0 0.0
      %462 = vmatprep.subr.mxu0 0.0
      %463 = vmatpush1.msra.mxu0 0.0
      %464 = vmatprep.subr.mxu0 0.0
      %465 = vmatpush1.msra.mxu0 0.0
      %466 = vmatprep.subr.mxu0 0.0
      %467 = vmatpush1.msra.mxu0 0.0
      %468 = vmatprep.subr.mxu0 0.0
      %469 = vmatpush1.msra.mxu0 0.0
      %470 = vmatprep.subr.mxu0 0.0
      %471 = vmatpush1.msra.mxu0 0.0
      %472 = vmatprep.subr.mxu0 0.0
      %473 = vmatpush1.msra.mxu0 0.0
      %474 = vmatprep.subr.mxu0 0.0
      %475 = vmatpush1.msra.mxu0 0.0
      %476 = vmatprep.subr.mxu0 0.0
      %477 = vmatpush1.msra.mxu0 0.0
      %478 = vmatprep.subr.mxu0 0.0
      %479 = vmatpush1.msra.mxu0 0.0
      %480 = vmatprep.subr.mxu0 0.0
      %481 = vmatpush1.msra.mxu0 0.0
      %482 = vmatprep.subr.mxu0 0.0
      %483 = vmatpush1.msra.mxu0 0.0
      %484 = vmatprep.subr.mxu0 0.0
      %485 = vmatpush1.msra.mxu0 0.0
      %486 = vmatprep.subr.mxu0 0.0
      %487 = vmatpush1.msra.mxu0 0.0
      %488 = vmatprep.subr.mxu0 0.0
      %489 = vmatpush1.msra.mxu0 0.0
      %490 = vmatprep.subr.mxu0 0.0
      %491 = vmatpush1.msra.mxu0 0.0
      %492 = vmatprep.mubr.f32.mxu0 0.0
      %v493 = vand.u32 %v272, 4294901760
      %v494 = vsub.f32 %v272, %v493
      %495 = vmatmul.mubr.f32.gmra.mrb[0].mxu0 %v494
      %v496 = vpop.f32.mrb[0].mxu0
      %v497 = vadd.f32 %v423, %v496
      %v498 = vpop.f32.mrb[0].mxu0
      %499 = vdwg.mxu0
      %500 = vmatprep.subr.mxu0 0.0
      %v501 = vand.u32 %v269, 4294901760
      %502 = vmatpush1.msra.mxu0 %v501
      %503 = vmatprep.subr.mxu0 0.0
      %504 = vmatpush1.msra.mxu0 0.0
      %505 = vmatprep.subr.mxu0 0.0
      %506 = vmatpush1.msra.mxu0 0.0
      %507 = vmatprep.subr.mxu0 0.0
      %508 = vmatpush1.msra.mxu0 0.0
      %509 = vmatprep.subr.mxu0 0.0
      %510 = vmatpush1.msra.mxu0 0.0
      %511 = vmatprep.subr.mxu0 0.0
      %512 = vmatpush1.msra.mxu0 0.0
      %513 = vmatprep.subr.mxu0 0.0
      %514 = vmatpush1.msra.mxu0 0.0
      %515 = vmatprep.subr.mxu0 0.0
      %516 = vmatpush1.msra.mxu0 0.0
      %517 = vmatprep.subr.mxu0 0.0
      %518 = vmatpush1.msra.mxu0 0.0
      %519 = vmatprep.subr.mxu0 0.0
      %520 = vmatpush1.msra.mxu0 0.0
      %521 = vmatprep.subr.mxu0 0.0
      %522 = vmatpush1.msra.mxu0 0.0
      %523 = vmatprep.subr.mxu0 0.0
      %524 = vmatpush1.msra.mxu0 0.0
      %525 = vmatprep.subr.mxu0 0.0
      %526 = vmatpush1.msra.mxu0 0.0
      %527 = vmatprep.subr.mxu0 0.0
      %528 = vmatpush1.msra.mxu0 0.0
      %529 = vmatprep.subr.mxu0 0.0
      %530 = vmatpush1.msra.mxu0 0.0
      %531 = vmatprep.subr.mxu0 0.0
      %532 = vmatpush1.msra.mxu0 0.0
      %533 = vmatprep.subr.mxu0 0.0
      %534 = vmatpush1.msra.mxu0 0.0
      %535 = vmatprep.subr.mxu0 0.0
      %536 = vmatpush1.msra.mxu0 0.0
      %537 = vmatprep.subr.mxu0 0.0
      %538 = vmatpush1.msra.mxu0 0.0
      %539 = vmatprep.subr.mxu0 0.0
      %540 = vmatpush1.msra.mxu0 0.0
      %541 = vmatprep.subr.mxu0 0.0
      %542 = vmatpush1.msra.mxu0 0.0
      %543 = vmatprep.subr.mxu0 0.0
      %544 = vmatpush1.msra.mxu0 0.0
      %545 = vmatprep.subr.mxu0 0.0
      %546 = vmatpush1.msra.mxu0 0.0
      %547 = vmatprep.subr.mxu0 0.0
      %548 = vmatpush1.msra.mxu0 0.0
      %549 = vmatprep.subr.mxu0 0.0
      %550 = vmatpush1.msra.mxu0 0.0
      %551 = vmatprep.subr.mxu0 0.0
      %552 = vmatpush1.msra.mxu0 0.0
      %553 = vmatprep.subr.mxu0 0.0
      %554 = vmatpush1.msra.mxu0 0.0
      %555 = vmatprep.subr.mxu0 0.0
      %556 = vmatpush1.msra.mxu0 0.0
      %557 = vmatprep.subr.mxu0 0.0
      %558 = vmatpush1.msra.mxu0 0.0
      %559 = vmatprep.subr.mxu0 0.0
      %560 = vmatpush1.msra.mxu0 0.0
      %561 = vmatprep.subr.mxu0 0.0
      %562 = vmatpush1.msra.mxu0 0.0
      %563 = vmatprep.subr.mxu0 0.0
      %564 = vmatpush1.msra.mxu0 0.0
      %565 = vmatprep.mubr.f32.mxu0 0.0
      %v566 = vand.u32 %v272, 4294901760
      %v567 = vsub.f32 %v272, %v566
      %v568 = vand.u32 %v567, 4294901760
      %569 = vmatmul.mubr.f32.gmra.mrb[0].mxu0 %v568
      %v570 = vpop.f32.mrb[0].mxu0
      %v571 = vadd.f32 %v497, %v570
      %v572 = vpop.f32.mrb[0].mxu0
      %573 = vdwg.mxu0
      %574 = vmatprep.subr.mxu0 0.0
      %v575 = vand.u32 %v269, 4294901760
      %v576 = vsub.f32 %v269, %v575
      %v577 = vand.u32 %v576, 4294901760
      %578 = vmatpush1.msra.mxu0 %v577
      %579 = vmatprep.subr.mxu0 0.0
      %580 = vmatpush1.msra.mxu0 0.0
      %581 = vmatprep.subr.mxu0 0.0
      %582 = vmatpush1.msra.mxu0 0.0
      %583 = vmatprep.subr.mxu0 0.0
      %584 = vmatpush1.msra.mxu0 0.0
      %585 = vmatprep.subr.mxu0 0.0
      %586 = vmatpush1.msra.mxu0 0.0
      %587 = vmatprep.subr.mxu0 0.0
      %588 = vmatpush1.msra.mxu0 0.0
      %589 = vmatprep.subr.mxu0 0.0
      %590 = vmatpush1.msra.mxu0 0.0
      %591 = vmatprep.subr.mxu0 0.0
      %592 = vmatpush1.msra.mxu0 0.0
      %593 = vmatprep.subr.mxu0 0.0
      %594 = vmatpush1.msra.mxu0 0.0
      %595 = vmatprep.subr.mxu0 0.0
      %596 = vmatpush1.msra.mxu0 0.0
      %597 = vmatprep.subr.mxu0 0.0
      %598 = vmatpush1.msra.mxu0 0.0
      %599 = vmatprep.subr.mxu0 0.0
      %600 = vmatpush1.msra.mxu0 0.0
      %601 = vmatprep.subr.mxu0 0.0
      %602 = vmatpush1.msra.mxu0 0.0
      %603 = vmatprep.subr.mxu0 0.0
      %604 = vmatpush1.msra.mxu0 0.0
      %605 = vmatprep.subr.mxu0 0.0
      %606 = vmatpush1.msra.mxu0 0.0
      %607 = vmatprep.subr.mxu0 0.0
      %608 = vmatpush1.msra.mxu0 0.0
      %609 = vmatprep.subr.mxu0 0.0
      %610 = vmatpush1.msra.mxu0 0.0
      %611 = vmatprep.subr.mxu0 0.0
      %612 = vmatpush1.msra.mxu0 0.0
      %613 = vmatprep.subr.mxu0 0.0
      %614 = vmatpush1.msra.mxu0 0.0
      %615 = vmatprep.subr.mxu0 0.0
      %616 = vmatpush1.msra.mxu0 0.0
      %617 = vmatprep.subr.mxu0 0.0
      %618 = vmatpush1.msra.mxu0 0.0
      %619 = vmatprep.subr.mxu0 0.0
      %620 = vmatpush1.msra.mxu0 0.0
      %621 = vmatprep.subr.mxu0 0.0
      %622 = vmatpush1.msra.mxu0 0.0
      %623 = vmatprep.subr.mxu0 0.0
      %624 = vmatpush1.msra.mxu0 0.0
      %625 = vmatprep.subr.mxu0 0.0
      %626 = vmatpush1.msra.mxu0 0.0
      %627 = vmatprep.subr.mxu0 0.0
      %628 = vmatpush1.msra.mxu0 0.0
      %629 = vmatprep.subr.mxu0 0.0
      %630 = vmatpush1.msra.mxu0 0.0
      %631 = vmatprep.subr.mxu0 0.0
      %632 = vmatpush1.msra.mxu0 0.0
      %633 = vmatprep.subr.mxu0 0.0
      %634 = vmatpush1.msra.mxu0 0.0
      %635 = vmatprep.subr.mxu0 0.0
      %636 = vmatpush1.msra.mxu0 0.0
      %637 = vmatprep.subr.mxu0 0.0
      %638 = vmatpush1.msra.mxu0 0.0
      %639 = vmatprep.subr.mxu0 0.0
      %640 = vmatpush1.msra.mxu0 0.0
      %641 = vmatprep.mubr.f32.mxu0 0.0
      %v642 = vand.u32 %v272, 4294901760
      %643 = vmatmul.mubr.f32.gmra.mrb[0].mxu0 %v642
      %v644 = vpop.f32.mrb[0].mxu0
      %v645 = vadd.f32 %v571, %v644
      %v646 = vpop.f32.mrb[0].mxu0
      %647 = vdwg.mxu0
      %648 = vmatprep.subr.mxu0 0.0
      %v649 = vand.u32 %v269, 4294901760
      %650 = vmatpush1.msra.mxu0 %v649
      %651 = vmatprep.subr.mxu0 0.0
      %652 = vmatpush1.msra.mxu0 0.0
      %653 = vmatprep.subr.mxu0 0.0
      %654 = vmatpush1.msra.mxu0 0.0
      %655 = vmatprep.subr.mxu0 0.0
      %656 = vmatpush1.msra.mxu0 0.0
      %657 = vmatprep.subr.mxu0 0.0
      %658 = vmatpush1.msra.mxu0 0.0
      %659 = vmatprep.subr.mxu0 0.0
      %660 = vmatpush1.msra.mxu0 0.0
      %661 = vmatprep.subr.mxu0 0.0
      %662 = vmatpush1.msra.mxu0 0.0
      %663 = vmatprep.subr.mxu0 0.0
      %664 = vmatpush1.msra.mxu0 0.0
      %665 = vmatprep.subr.mxu0 0.0
      %666 = vmatpush1.msra.mxu0 0.0
      %667 = vmatprep.subr.mxu0 0.0
      %668 = vmatpush1.msra.mxu0 0.0
      %669 = vmatprep.subr.mxu0 0.0
      %670 = vmatpush1.msra.mxu0 0.0
      %671 = vmatprep.subr.mxu0 0.0
      %672 = vmatpush1.msra.mxu0 0.0
      %673 = vmatprep.subr.mxu0 0.0
      %674 = vmatpush1.msra.mxu0 0.0
      %675 = vmatprep.subr.mxu0 0.0
      %676 = vmatpush1.msra.mxu0 0.0
      %677 = vmatprep.subr.mxu0 0.0
      %678 = vmatpush1.msra.mxu0 0.0
      %679 = vmatprep.subr.mxu0 0.0
      %680 = vmatpush1.msra.mxu0 0.0
      %681 = vmatprep.subr.mxu0 0.0
      %682 = vmatpush1.msra.mxu0 0.0
      %683 = vmatprep.subr.mxu0 0.0
      %684 = vmatpush1.msra.mxu0 0.0
      %685 = vmatprep.subr.mxu0 0.0
      %686 = vmatpush1.msra.mxu0 0.0
      %687 = vmatprep.subr.mxu0 0.0
      %688 = vmatpush1.msra.mxu0 0.0
      %689 = vmatprep.subr.mxu0 0.0
      %690 = vmatpush1.msra.mxu0 0.0
      %691 = vmatprep.subr.mxu0 0.0
      %692 = vmatpush1.msra.mxu0 0.0
      %693 = vmatprep.subr.mxu0 0.0
      %694 = vmatpush1.msra.mxu0 0.0
      %695 = vmatprep.subr.mxu0 0.0
      %696 = vmatpush1.msra.mxu0 0.0
      %697 = vmatprep.subr.mxu0 0.0
      %698 = vmatpush1.msra.mxu0 0.0
      %699 = vmatprep.subr.mxu0 0.0
      %700 = vmatpush1.msra.mxu0 0.0
      %701 = vmatprep.subr.mxu0 0.0
      %702 = vmatpush1.msra.mxu0 0.0
      %703 = vmatprep.subr.mxu0 0.0
      %704 = vmatpush1.msra.mxu0 0.0
      %705 = vmatprep.subr.mxu0 0.0
      %706 = vmatpush1.msra.mxu0 0.0
      %707 = vmatprep.subr.mxu0 0.0
      %708 = vmatpush1.msra.mxu0 0.0
      %709 = vmatprep.subr.mxu0 0.0
      %710 = vmatpush1.msra.mxu0 0.0
      %711 = vmatprep.subr.mxu0 0.0
      %712 = vmatpush1.msra.mxu0 0.0
      %713 = vmatprep.mubr.f32.mxu0 0.0
      %v714 = vand.u32 %v272, 4294901760
      %715 = vmatmul.mubr.f32.gmra.mrb[0].mxu0 %v714
      %v716 = vpop.f32.mrb[0].mxu0
      %v717 = vadd.f32 %v645, %v716
      %v718 = vpop.f32.mrb[0].mxu0
      %719 = vdwg.mxu0
      %v720 = vand.u32 2147483647, %v717
      %vm721 = vcmp.le.f32.partialorder %v720, 0.7853982
      %vm722 = vcmp.lt.s32.totalorder %v717, 0
      %v723 = vand.u32 %v717, 2139095040
      %v724 = vshrl.u32 %v723, 23
      %v725 = vsub.s32 %v724, 127
      %v726 = vand.u32 2147483647, %v717
      %v727 = vand.u32 %v726, 8388607
      %v728 = vor.u32 %v727, 8388608
      %v729 = vsub.s32 0, %v728
      %v730 = vadd.s32 %v725, 1
      %vm731 = vcmp.gt.s32.totalorder %v730, 0
      %v732 = vsel %vm731, %v730, 0
      %v733 = vshrl.u32 %v732, 5
      %v734 = vand.u32 %v732, 31
      %v735 = vsub.s32 32, %v734
      %v736 = vshrl.u32 683565275, %v735
      %v737 = vshll.u32 683565275, %v734
      %v738 = vshrl.u32 2475754826, %v735
      %v739 = vor.u32 %v737, %v738
      %v740 = vshll.u32 2475754826, %v734
      %v741 = vshrl.u32 2131351028, %v735
      %v742 = vor.u32 %v740, %v741
      %v743 = vshll.u32 2131351028, %v734
      %v744 = vshrl.u32 2102212464, %v735
      %v745 = vor.u32 %v743, %v744
      %v746 = vshll.u32 2102212464, %v734
      %v747 = vshrl.u32 920167782, %v735
      %v748 = vor.u32 %v746, %v747
      %v749 = vshll.u32 920167782, %v734
      %v750 = vshrl.u32 1326507024, %v735
      %v751 = vor.u32 %v749, %v750
      %vm752 = vcmp.lt.s32.totalorder %v733, 1
      %vm753 = vcmp.lt.s32.totalorder %v733, 2
      %vm754 = vcmp.lt.s32.totalorder %v733, 3
      %vm755 = vcmp.lt.s32.totalorder %v733, 4
      %v756 = vsel %vm752, %v736, %v739
      %v757 = vsel %vm755, %v745, 2102212464
      %v758 = vsel %vm754, %v742, %v757
      %v759 = vsel %vm753, %v756, %v758
      %v760 = vsel %vm752, %v739, %v742
      %v761 = vsel %vm755, %v748, 920167782
      %v762 = vsel %vm754, %v745, %v761
      %v763 = vsel %vm753, %v760, %v762
      %v764 = vsel %vm752, %v742, %v745
      %v765 = vsel %vm755, %v751, 1326507024
      %v766 = vsel %vm754, %v748, %v765
      %v767 = vsel %vm753, %v764, %v766
      %v768 = vshll.u32 %v728, 8
      %v769 = vmul.u32.u64.compose %v768, %v767
      %v770 = vextract.low.u32 %v769
      %v771 = vextract.high.u32 %v769
      %v772 = vmul.u32.u64.compose %v768, %v763
      %v773 = vextract.low.u32 %v772
      %v774 = vextract.high.u32 %v772
      %v775 = vmul.u32 %v768, %v759
      %v776 = vadd.s32 %v771, %v773
      %vm777 = vc.u32 %v771, %v773
      %v778 = vadd.s32 %v774, 1
      %v779 = vsel %vm777, %v778, %v774
      %v780 = vadd.s32 %v775, %v779
      %v781 = vadd.s32 %v780, 536870912
      %v782 = vshrl.u32 %v781, 30
      %v783 = vshll.u32 %v782, 30
      %v784 = vsub.s32 %v780, %v783
      %vm785 = vcmp.lt.s32.totalorder %v784, 0
      %v786 = vsub.s32 0, %v784
      %v787 = vsel %vm785, %v786, %v784
      %v788 = vclz %v787
      %v789 = vsub.s32 %v788, 2
      %vm790 = vcmp.gt.s32.totalorder 0, %v789
      %v791 = vsel %vm790, 0, %v789
      %v792 = vsub.s32 32, %v791
      %v793 = vshll.u32 %v784, %v791
      %v794 = vshrl.u32 %v776, %v792
      %v795 = vor.u32 %v793, %v794
      %v796 = vsub.s32 4294967266, %v791
      %v797 = vadd.s32 %v796, 127
      %v798 = vshll.u32 %v797, 23
      %v799 = vor.u32 4788187, %v798
      %v800 = vand.u32 2147483647, %v799
      %v802 = vcvt.s32.f32 %v795
      %v803 = vmul.f32 %v802, %v800
      %v804 = vxor.u32 %v803, 2147483648
      %v805 = vsel %vm722, %v804, %v803
      %v806 = vsub.s32 4, %v782
      %v807 = vsel %vm722, %v806, %v782
      %v808 = vsel %vm721, %v717, %v805
      %v809 = vsel %vm721, 0, %v807
      %v810 = vcosq.f32.pop %v808
      %v811 = vsinq.f32.pop %v808
      %vm812 = vweird.f32 %v717
      %v813 = vadd.s32 %v809, 3
      %v814 = vand.u32 %v813, 3
      %vm815 = vcmp.lt.s32.totalorder %v814, 2
      %vm816 = vcmp.eq.s32.totalorder %v814, 0
      %v817 = vxor.u32 %v811, 2147483648
      %v818 = vsel %vm816, %v810, %v817
      %vm819 = vcmp.eq.s32.totalorder %v814, 2
      %v820 = vxor.u32 %v810, 2147483648
      %v821 = vsel %vm819, %v820, %v811
      %v822 = vsel %vm815, %v818, %v821
      %v823 = vsel %vm812, nan, %v822
      %v824 = vpack.c.bf16 %v823, %v823
      %825 = vst [vmem:[#allocation2] sm:$0xf] %v824
      %v826 = vand.u32 2147483647, %v717
      %vm827 = vcmp.le.f32.partialorder %v826, 0.7853982
      %vm828 = vcmp.lt.s32.totalorder %v717, 0
      %v829 = vand.u32 %v717, 2139095040
      %v830 = vshrl.u32 %v829, 23
      %v831 = vsub.s32 %v830, 127
      %v832 = vand.u32 2147483647, %v717
      %v833 = vand.u32 %v832, 8388607
      %v834 = vor.u32 %v833, 8388608
      %v835 = vsub.s32 0, %v834
      %v836 = vadd.s32 %v831, 1
      %vm837 = vcmp.gt.s32.totalorder %v836, 0
      %v838 = vsel %vm837, %v836, 0
      %v839 = vshrl.u32 %v838, 5
      %v840 = vand.u32 %v838, 31
      %v841 = vsub.s32 32, %v840
      %v842 = vshrl.u32 683565275, %v841
      %v843 = vshll.u32 683565275, %v840
      %v844 = vshrl.u32 2475754826, %v841
      %v845 = vor.u32 %v843, %v844
      %v846 = vshll.u32 2475754826, %v840
      %v847 = vshrl.u32 2131351028, %v841
      %v848 = vor.u32 %v846, %v847
      %v849 = vshll.u32 2131351028, %v840
      %v850 = vshrl.u32 2102212464, %v841
      %v851 = vor.u32 %v849, %v850
      %v852 = vshll.u32 2102212464, %v840
      %v853 = vshrl.u32 920167782, %v841
      %v854 = vor.u32 %v852, %v853
      %v855 = vshll.u32 920167782, %v840
      %v856 = vshrl.u32 1326507024, %v841
      %v857 = vor.u32 %v855, %v856
      %vm858 = vcmp.lt.s32.totalorder %v839, 1
      %vm859 = vcmp.lt.s32.totalorder %v839, 2
      %vm860 = vcmp.lt.s32.totalorder %v839, 3
      %vm861 = vcmp.lt.s32.totalorder %v839, 4
      %v862 = vsel %vm858, %v842, %v845
      %v863 = vsel %vm861, %v851, 2102212464
      %v864 = vsel %vm860, %v848, %v863
      %v865 = vsel %vm859, %v862, %v864
      %v866 = vsel %vm858, %v845, %v848
      %v867 = vsel %vm861, %v854, 920167782
      %v868 = vsel %vm860, %v851, %v867
      %v869 = vsel %vm859, %v866, %v868
      %v870 = vsel %vm858, %v848, %v851
      %v871 = vsel %vm861, %v857, 1326507024
      %v872 = vsel %vm860, %v854, %v871
      %v873 = vsel %vm859, %v870, %v872
      %v874 = vshll.u32 %v834, 8
      %v875 = vmul.u32.u64.compose %v874, %v873
      %v876 = vextract.low.u32 %v875
      %v877 = vextract.high.u32 %v875
      %v878 = vmul.u32.u64.compose %v874, %v869
      %v879 = vextract.low.u32 %v878
      %v880 = vextract.high.u32 %v878
      %v881 = vmul.u32 %v874, %v865
      %v882 = vadd.s32 %v877, %v879
      %vm883 = vc.u32 %v877, %v879
      %v884 = vadd.s32 %v880, 1
      %v885 = vsel %vm883, %v884, %v880
      %v886 = vadd.s32 %v881, %v885
      %v887 = vadd.s32 %v886, 536870912
      %v888 = vshrl.u32 %v887, 30
      %v889 = vshll.u32 %v888, 30
      %v890 = vsub.s32 %v886, %v889
      %vm891 = vcmp.lt.s32.totalorder %v890, 0
      %v892 = vsub.s32 0, %v890
      %v893 = vsel %vm891, %v892, %v890
      %v894 = vclz %v893
      %v895 = vsub.s32 %v894, 2
      %vm896 = vcmp.gt.s32.totalorder 0, %v895
      %v897 = vsel %vm896, 0, %v895
      %v898 = vsub.s32 32, %v897
      %v899 = vshll.u32 %v890, %v897
      %v900 = vshrl.u32 %v882, %v898
      %v901 = vor.u32 %v899, %v900
      %v902 = vsub.s32 4294967266, %v897
      %v903 = vadd.s32 %v902, 127
      %v904 = vshll.u32 %v903, 23
      %v905 = vor.u32 4788187, %v904
      %v906 = vand.u32 2147483647, %v905
      %v908 = vcvt.s32.f32 %v901
      %v909 = vmul.f32 %v908, %v906
      %v910 = vxor.u32 %v909, 2147483648
      %v911 = vsel %vm828, %v910, %v909
      %v912 = vsub.s32 4, %v888
      %v913 = vsel %vm828, %v912, %v888
      %v914 = vsel %vm827, %v717, %v911
      %v915 = vsel %vm827, 0, %v913
      %v916 = vcosq.f32.pop %v914
      %v917 = vsinq.f32.pop %v914
      %vm918 = vweird.f32 %v717
      %v919 = vand.u32 %v915, 3
      %vm920 = vcmp.lt.s32.totalorder %v919, 2
      %vm921 = vcmp.eq.s32.totalorder %v919, 0
      %v922 = vxor.u32 %v917, 2147483648
      %v923 = vsel %vm921, %v916, %v922
      %vm924 = vcmp.eq.s32.totalorder %v919, 2
      %v925 = vxor.u32 %v916, 2147483648
      %v926 = vsel %vm924, %v925, %v917
      %v927 = vsel %vm920, %v923, %v926
      %v928 = vsel %vm918, nan, %v927
      %v929 = vpack.c.bf16 %v928, %v928
      %930 = vst [vmem:[#allocation2 + $0x4] sm:$0xf] %v929
      %v931 = vld [vmem:[#allocation2] sm:$0xff]
      %v932 = vld [vmem:[%s3] sm:$0xf]
      %v933 = vld [vmem:[%s3 + $0x4] sm:$0xf]
      %v934 = vld [vmem:[%s3 + $0x8] sm:$0xf]
      %v935 = vld [vmem:[%s3 + $0xc] sm:$0xf]
      %v936 = vld [vmem:[%s3 + $0x10] sm:$0xf]
      %v937 = vld [vmem:[%s3 + $0x14] sm:$0xf]
      %v938 = vld [vmem:[%s3 + $0x18] sm:$0xf]
      %v939 = vld [vmem:[%s3 + $0x1c] sm:$0xf]
      %v940 = vld [vmem:[%s3 + $0x20] sm:$0xf]
      %v941 = vld [vmem:[%s3 + $0x24] sm:$0xf]
      %v942 = vld [vmem:[%s3 + $0x28] sm:$0xf]
      %v943 = vld [vmem:[%s3 + $0x2c] sm:$0xf]
      %v944 = vld [vmem:[%s3 + $0x30] sm:$0xf]
      %v945 = vld [vmem:[%s3 + $0x34] sm:$0xf]
      %v946 = vld [vmem:[%s3 + $0x38] sm:$0xf]
      %v947 = vld [vmem:[%s3 + $0x3c] sm:$0xf]
      %v948 = vld [vmem:[%s3 + $0x40] sm:$0xf]
      %v949 = vld [vmem:[%s3 + $0x44] sm:$0xf]
      %v950 = vld [vmem:[%s3 + $0x48] sm:$0xf]
      %v951 = vld [vmem:[%s3 + $0x4c] sm:$0xf]
      %v952 = vld [vmem:[%s3 + $0x50] sm:$0xf]
      %v953 = vld [vmem:[%s3 + $0x54] sm:$0xf]
      %v954 = vld [vmem:[%s3 + $0x58] sm:$0xf]
      %v955 = vld [vmem:[%s3 + $0x5c] sm:$0xf]
      %v956 = vld [vmem:[%s3 + $0x60] sm:$0xf]
      %v957 = vld [vmem:[%s3 + $0x64] sm:$0xf]
      %v958 = vld [vmem:[%s3 + $0x68] sm:$0xf]
      %v959 = vld [vmem:[%s3 + $0x6c] sm:$0xf]
      %v960 = vld [vmem:[%s3 + $0x70] sm:$0xf]
      %v961 = vld [vmem:[%s3 + $0x74] sm:$0xf]
      %v962 = vld [vmem:[%s3 + $0x78] sm:$0xf]
      %v963 = vld [vmem:[%s3 + $0x7c] sm:$0xf]
      %v964 = vld [vmem:[%s262] sm:$0xff]
      %v965 = vld [vmem:[%s4] sm:$0xf]
      %v966 = vld [vmem:[%s4 + $0x4] sm:$0xf]
      %v967 = vld [vmem:[%s4 + $0x8] sm:$0xf]
      %v968 = vld [vmem:[%s4 + $0xc] sm:$0xf]
      %v969 = vld [vmem:[%s4 + $0x10] sm:$0xf]
      %v970 = vld [vmem:[%s4 + $0x14] sm:$0xf]
      %v971 = vld [vmem:[%s4 + $0x18] sm:$0xf]
      %v972 = vld [vmem:[%s4 + $0x1c] sm:$0xf]
      %v973 = vld [vmem:[%s4 + $0x20] sm:$0xf]
      %v974 = vld [vmem:[%s4 + $0x24] sm:$0xf]
      %v975 = vld [vmem:[%s4 + $0x28] sm:$0xf]
      %v976 = vld [vmem:[%s4 + $0x2c] sm:$0xf]
      %v977 = vld [vmem:[%s4 + $0x30] sm:$0xf]
      %v978 = vld [vmem:[%s4 + $0x34] sm:$0xf]
      %v979 = vld [vmem:[%s4 + $0x38] sm:$0xf]
      %v980 = vld [vmem:[%s4 + $0x3c] sm:$0xf]
      %v981 = vld [vmem:[%s4 + $0x40] sm:$0xf]
      %v982 = vld [vmem:[%s4 + $0x44] sm:$0xf]
      %v983 = vld [vmem:[%s4 + $0x48] sm:$0xf]
      %v984 = vld [vmem:[%s4 + $0x4c] sm:$0xf]
      %v985 = vld [vmem:[%s4 + $0x50] sm:$0xf]
      %v986 = vld [vmem:[%s4 + $0x54] sm:$0xf]
      %v987 = vld [vmem:[%s4 + $0x58] sm:$0xf]
      %v988 = vld [vmem:[%s4 + $0x5c] sm:$0xf]
      %v989 = vld [vmem:[%s4 + $0x60] sm:$0xf]
      %v990 = vld [vmem:[%s4 + $0x64] sm:$0xf]
      %v991 = vld [vmem:[%s4 + $0x68] sm:$0xf]
      %v992 = vld [vmem:[%s4 + $0x6c] sm:$0xf]
      %v993 = vld [vmem:[%s4 + $0x70] sm:$0xf]
      %v994 = vld [vmem:[%s4 + $0x74] sm:$0xf]
      %v995 = vld [vmem:[%s4 + $0x78] sm:$0xf]
      %v996 = vld [vmem:[%s4 + $0x7c] sm:$0xf]
      %v998 = vunpack.c.l.b16 %v964
      %v999 = vunpack.c.h.b16 %v964
      %v1000 = vpack.c.b16 %v998, %v998
      %v1001 = vpack.c.b16 %v999, %v999
      %v1036 = vunpack.c.l.b16 %v965
      %v1037 = vunpack.c.l.b16 %v966
      %v1038 = vunpack.c.l.b16 %v967
      %v1039 = vunpack.c.l.b16 %v968
      %v1040 = vunpack.c.l.b16 %v969
      %v1041 = vunpack.c.l.b16 %v970
      %v1042 = vunpack.c.l.b16 %v971
      %v1043 = vunpack.c.l.b16 %v972
      %v1044 = vunpack.c.l.b16 %v973
      %v1045 = vunpack.c.l.b16 %v974
      %v1046 = vunpack.c.l.b16 %v975
      %v1047 = vunpack.c.l.b16 %v976
      %v1048 = vunpack.c.l.b16 %v977
      %v1049 = vunpack.c.l.b16 %v978
      %v1050 = vunpack.c.l.b16 %v979
      %v1051 = vunpack.c.l.b16 %v980
      %v1052 = vunpack.c.l.b16 %v981
      %v1053 = vunpack.c.l.b16 %v982
      %v1054 = vunpack.c.l.b16 %v983
      %v1055 = vunpack.c.l.b16 %v984
      %v1056 = vunpack.c.l.b16 %v985
      %v1057 = vunpack.c.l.b16 %v986
      %v1058 = vunpack.c.l.b16 %v987
      %v1059 = vunpack.c.l.b16 %v988
      %v1060 = vunpack.c.l.b16 %v989
      %v1061 = vunpack.c.l.b16 %v990
      %v1062 = vunpack.c.l.b16 %v991
      %v1063 = vunpack.c.l.b16 %v992
      %v1064 = vunpack.c.l.b16 %v993
      %v1065 = vunpack.c.l.b16 %v994
      %v1066 = vunpack.c.l.b16 %v995
      %v1067 = vunpack.c.l.b16 %v996
      %v1068 = vpack.c.b16 %v1037, %v1036
      %v1069 = vpack.c.b16 %v1039, %v1038
      %v1070 = vpack.c.b16 %v1041, %v1040
      %v1071 = vpack.c.b16 %v1043, %v1042
      %v1072 = vpack.c.b16 %v1045, %v1044
      %v1073 = vpack.c.b16 %v1047, %v1046
      %v1074 = vpack.c.b16 %v1049, %v1048
      %v1075 = vpack.c.b16 %v1051, %v1050
      %v1076 = vpack.c.b16 %v1053, %v1052
      %v1077 = vpack.c.b16 %v1055, %v1054
      %v1078 = vpack.c.b16 %v1057, %v1056
      %v1079 = vpack.c.b16 %v1059, %v1058
      %v1080 = vpack.c.b16 %v1061, %v1060
      %v1081 = vpack.c.b16 %v1063, %v1062
      %v1082 = vpack.c.b16 %v1065, %v1064
      %v1083 = vpack.c.b16 %v1067, %v1066
      %1100 = vmatprep.subr.bf16.mxu0 0
      %1101 = vmatpush1.bf16.msra.mxu0 %v1068
      %1102 = vmatprep.subr.bf16.mxu0 0
      %1103 = vmatpush1.bf16.msra.mxu0 %v1069
      %1104 = vmatprep.subr.bf16.mxu0 0
      %1105 = vmatpush1.bf16.msra.mxu0 %v1070
      %1106 = vmatprep.subr.bf16.mxu0 0
      %1107 = vmatpush1.bf16.msra.mxu0 %v1071
      %1108 = vmatprep.subr.bf16.mxu0 0
      %1109 = vmatpush1.bf16.msra.mxu0 %v1072
      %1110 = vmatprep.subr.bf16.mxu0 0
      %1111 = vmatpush1.bf16.msra.mxu0 %v1073
      %1112 = vmatprep.subr.bf16.mxu0 0
      %1113 = vmatpush1.bf16.msra.mxu0 %v1074
      %1114 = vmatprep.subr.bf16.mxu0 0
      %1115 = vmatpush1.bf16.msra.mxu0 %v1075
      %1116 = vmatprep.subr.bf16.mxu0 0
      %1117 = vmatpush1.bf16.msra.mxu0 %v1076
      %1118 = vmatprep.subr.bf16.mxu0 0
      %1119 = vmatpush1.bf16.msra.mxu0 %v1077
      %1120 = vmatprep.subr.bf16.mxu0 0
      %1121 = vmatpush1.bf16.msra.mxu0 %v1078
      %1122 = vmatprep.subr.bf16.mxu0 0
      %1123 = vmatpush1.bf16.msra.mxu0 %v1079
      %1124 = vmatprep.subr.bf16.mxu0 0
      %1125 = vmatpush1.bf16.msra.mxu0 %v1080
      %1126 = vmatprep.subr.bf16.mxu0 0
      %1127 = vmatpush1.bf16.msra.mxu0 %v1081
      %1128 = vmatprep.subr.bf16.mxu0 0
      %1129 = vmatpush1.bf16.msra.mxu0 %v1082
      %1130 = vmatprep.subr.bf16.mxu0 0
      %1131 = vmatpush1.bf16.msra.mxu0 %v1083
      %1132 = vmatprep.mubr.bf16.mxu0 %v1001
      %1133 = vmatmul.mubr.bf16.gmra.mrb[0].mxu0 %v1000
      %v1134 = vpop.f32.mrb[0].mxu0
      %v1135 = vadd.f32 0.0, %v1134
      %v1136 = vpop.f32.mrb[0].mxu0
      %v1137 = vpop.f32.mrb[0].mxu0
      %v1138 = vpop.f32.mrb[0].mxu0
      %1139 = vdwg.mxu0
      %v1141 = vunpack.c.l.b16 %v931
      %v1142 = vunpack.c.h.b16 %v931
      %v1143 = vpack.c.b16 %v1141, %v1141
      %v1144 = vpack.c.b16 %v1142, %v1142
      %v1179 = vunpack.c.l.b16 %v932
      %v1180 = vunpack.c.l.b16 %v933
      %v1181 = vunpack.c.l.b16 %v934
      %v1182 = vunpack.c.l.b16 %v935
      %v1183 = vunpack.c.l.b16 %v936
      %v1184 = vunpack.c.l.b16 %v937
      %v1185 = vunpack.c.l.b16 %v938
      %v1186 = vunpack.c.l.b16 %v939
      %v1187 = vunpack.c.l.b16 %v940
      %v1188 = vunpack.c.l.b16 %v941
      %v1189 = vunpack.c.l.b16 %v942
      %v1190 = vunpack.c.l.b16 %v943
      %v1191 = vunpack.c.l.b16 %v944
      %v1192 = vunpack.c.l.b16 %v945
      %v1193 = vunpack.c.l.b16 %v946
      %v1194 = vunpack.c.l.b16 %v947
      %v1195 = vunpack.c.l.b16 %v948
      %v1196 = vunpack.c.l.b16 %v949
      %v1197 = vunpack.c.l.b16 %v950
      %v1198 = vunpack.c.l.b16 %v951
      %v1199 = vunpack.c.l.b16 %v952
      %v1200 = vunpack.c.l.b16 %v953
      %v1201 = vunpack.c.l.b16 %v954
      %v1202 = vunpack.c.l.b16 %v955
      %v1203 = vunpack.c.l.b16 %v956
      %v1204 = vunpack.c.l.b16 %v957
      %v1205 = vunpack.c.l.b16 %v958
      %v1206 = vunpack.c.l.b16 %v959
      %v1207 = vunpack.c.l.b16 %v960
      %v1208 = vunpack.c.l.b16 %v961
      %v1209 = vunpack.c.l.b16 %v962
      %v1210 = vunpack.c.l.b16 %v963
      %v1211 = vpack.c.b16 %v1180, %v1179
      %v1212 = vpack.c.b16 %v1182, %v1181
      %v1213 = vpack.c.b16 %v1184, %v1183
      %v1214 = vpack.c.b16 %v1186, %v1185
      %v1215 = vpack.c.b16 %v1188, %v1187
      %v1216 = vpack.c.b16 %v1190, %v1189
      %v1217 = vpack.c.b16 %v1192, %v1191
      %v1218 = vpack.c.b16 %v1194, %v1193
      %v1219 = vpack.c.b16 %v1196, %v1195
      %v1220 = vpack.c.b16 %v1198, %v1197
      %v1221 = vpack.c.b16 %v1200, %v1199
      %v1222 = vpack.c.b16 %v1202, %v1201
      %v1223 = vpack.c.b16 %v1204, %v1203
      %v1224 = vpack.c.b16 %v1206, %v1205
      %v1225 = vpack.c.b16 %v1208, %v1207
      %v1226 = vpack.c.b16 %v1210, %v1209
      %1243 = vmatprep.subr.bf16.mxu0 0
      %1244 = vmatpush1.bf16.msra.mxu0 %v1211
      %1245 = vmatprep.subr.bf16.mxu0 0
      %1246 = vmatpush1.bf16.msra.mxu0 %v1212
      %1247 = vmatprep.subr.bf16.mxu0 0
      %1248 = vmatpush1.bf16.msra.mxu0 %v1213
      %1249 = vmatprep.subr.bf16.mxu0 0
      %1250 = vmatpush1.bf16.msra.mxu0 %v1214
      %1251 = vmatprep.subr.bf16.mxu0 0
      %1252 = vmatpush1.bf16.msra.mxu0 %v1215
      %1253 = vmatprep.subr.bf16.mxu0 0
      %1254 = vmatpush1.bf16.msra.mxu0 %v1216
      %1255 = vmatprep.subr.bf16.mxu0 0
      %1256 = vmatpush1.bf16.msra.mxu0 %v1217
      %1257 = vmatprep.subr.bf16.mxu0 0
      %1258 = vmatpush1.bf16.msra.mxu0 %v1218
      %1259 = vmatprep.subr.bf16.mxu0 0
      %1260 = vmatpush1.bf16.msra.mxu0 %v1219
      %1261 = vmatprep.subr.bf16.mxu0 0
      %1262 = vmatpush1.bf16.msra.mxu0 %v1220
      %1263 = vmatprep.subr.bf16.mxu0 0
      %1264 = vmatpush1.bf16.msra.mxu0 %v1221
      %1265 = vmatprep.subr.bf16.mxu0 0
      %1266 = vmatpush1.bf16.msra.mxu0 %v1222
      %1267 = vmatprep.subr.bf16.mxu0 0
      %1268 = vmatpush1.bf16.msra.mxu0 %v1223
      %1269 = vmatprep.subr.bf16.mxu0 0
      %1270 = vmatpush1.bf16.msra.mxu0 %v1224
      %1271 = vmatprep.subr.bf16.mxu0 0
      %1272 = vmatpush1.bf16.msra.mxu0 %v1225
      %1273 = vmatprep.subr.bf16.mxu0 0
      %1274 = vmatpush1.bf16.msra.mxu0 %v1226
      %1275 = vmatprep.mubr.bf16.mxu0 %v1144
      %1276 = vmatmul.mubr.bf16.gmra.mrb[0].mxu0 %v1143
      %v1277 = vpop.f32.mrb[0].mxu0
      %v1278 = vadd.f32 %v1135, %v1277
      %v1279 = vpop.f32.mrb[0].mxu0
      %v1280 = vpop.f32.mrb[0].mxu0
      %v1281 = vpop.f32.mrb[0].mxu0
      %1282 = vdwg.mxu0
      %v1283 = vld [vmem:[%s5] sm:$0x1]
      %v1285 = vlaneseq
      %v1286 = vshrl.u32 %v1285, 7
      %v1287 = vsub.s32 0, %v1286
      %v1288 = vrot.slane %v1283, %v1287
      %v1290 = vadd.f32 %v1278, %v1288
      %v1291 = vmax.f32 %v1290, 0.0
      %v1292 = vpack.c.bf16 %v1291, %v1291
      %1293 = vst [vmem:[%s266] sm:$0xf] %v1292
      %p1294 = scmp.lt.s32.totalorder %s17, 1
      %s1295 = scalar_select %p1294, %s17, 1
      %s1296 = smul.addr %s1295, 4
      %s1297 = scalar_lea.vmem %s6, %s1296
      // Predicated region
      $region45: #{fast_rcnn_forward.1} parent=43 // pred_check
        %p1298 = pneg %p171
      $region46: #{fast_rcnn_forward.1} parent=43 // pred_check_branch
        %1300 = sbr.rel (%p1298) target = $region48
      $region47: #{fast_rcnn_forward.1} parent=43 // pred_region
        _
      $region48: #{fast_rcnn_forward.1} parent=43 // pred_fallthru
        _
    $region44: #{fast_rcnn_forward.1} parent=5 // pred_fallthru
      _
    %p1301 = scmp.le.s32.totalorder 2, %s12
    // Predicated region
    $region49: #{fast_rcnn_forward.1} parent=5 // pred_check
      %p1302 = pneg %p1301
    $region50: #{fast_rcnn_forward.1} parent=5 // pred_check_branch
      %1304 = sbr.rel (%p1302) target = $region52
    $region51: #{fast_rcnn_forward.1} parent=5 // pred_region
      %s1305 = ssub.s32 %s12, 2
      // Predicated region
      $region53: #{fast_rcnn_forward.1} parent=51 // pred_check
        %p1306 = pneg %p177
      $region54: #{fast_rcnn_forward.1} parent=51 // pred_check_branch
        %1308 = sbr.rel (%p1306) target = $region56
      $region55: #{fast_rcnn_forward.1} parent=51 // pred_region
        %p1309 = scmp.lt.s32.totalorder %s18, 1
        %s1310 = scalar_select %p1309, %s18, 1
        %s1311 = smul.addr %s1310, 4
        %s1312 = scalar_lea.vmem %s6, %s1311
      $region56: #{fast_rcnn_forward.1} parent=51 // pred_fallthru
        _
    $region52: #{fast_rcnn_forward.1} parent=5 // pred_fallthru
      _
  $region6: #{fast_rcnn_forward.1} parent=0 // loop_footer
    %s16 = sadd.s32 1, %s12
  $region7: #{fast_rcnn_forward.1} parent=0 // loop_footer_branch
    %11 = sbr.rel target = $region3
  $region8: #{fast_rcnn_forward.1} parent=0 // loop_exit
    _

// kernel: fast_rcnn_forward.1
$region0: #{fast_rcnn_forward.1}
  #allocation0 [shape = 'u32[]', space=smem, size = 0x4, offset = 0x4, fixed_abs, tag = 'smem constant byte address 0x4 - core index']
  #allocation1 [shape = 'u32[144,128]{1,0:T(1,128)}', space=vmem, size = 0x12000, scoped, tag = 'internal scratch']
  #allocation2 [shape = 'bf16[8,256]{1,0:T(8,128)(2,1)}', space=vmem, size = 0x1000, scoped, tag = 'scratch operand']
  %s0 = inlined_call_operand.vmem [shape: f32[16,8], index: 0, kind: input, shape index: {}]
  %s1 = inlined_call_operand.vmem [shape: bf16[16,256], index: 1, kind: input, shape index: {}]
  %s2 = inlined_call_operand.vmem [shape: f32[8,128], index: 2, kind: input, shape index: {}]
  %s3 = inlined_call_operand.vmem [shape: bf16[256,128], index: 3, kind: input, shape index: {}]
  %s4 = inlined_call_operand.vmem [shape: bf16[256,128], index: 4, kind: input, shape index: {}]
  %s5 = inlined_call_operand.vmem [shape: f32[1,128], index: 5, kind: input, shape index: {}]
  %s6 = inlined_call_operand.vmem [shape: bf16[16,128], index: 6, kind: output, shape index: {}]
  %s7 = sld [smem:[#allocation0]]
  $region57: #{fast_rcnn_forward.1} parent=0
    _
  %s9 = ssub.s32 1, %s7
  %s10 = scalar_select 0, %s9, %s7
  loop: start=0, step=1, limit=4
  $region2: #{fast_rcnn_forward.1} parent=0 // loop_pre_header
    _
  $region3: #{fast_rcnn_forward.1} parent=0 // loop_header
    %s12 = sphi 0, %s16
    %p13 = scmp.ge.s32.totalorder %s12, 4
    %s22 = sphi 0, %s24
    %s25 = sphi 0, %s22
    %s26 = sphi 0, %s25
    %s42 = sphi 0, %s26
    %s48 = sphi 0, %s50
    %s51 = sphi 0, %s48
    %s52 = sphi 0, %s51
    %s68 = sphi 0, %s52
    %s72 = sphi 0, %s72
    %s74 = sphi 0, %s72
    %s75 = sphi 0, %s74
    %s89 = sphi 0, %s75
    %s93 = sphi 0, %s93
    %s95 = sphi 0, %s93
    %s96 = sphi 0, %s95
    %s110 = sphi 0, %s96
    %s114 = sphi 0, %s114
    %s116 = sphi 0, %s114
    %s117 = sphi 0, %s116
    %s131 = sphi 0, %s117
    %s135 = sphi 0, %s135
    %s137 = sphi 0, %s135
    %s138 = sphi 0, %s137
    %s152 = sphi 0, %s138
    %s158 = sphi 0, %s160
    %s161 = sphi 0, %s158
    %s162 = sphi 0, %s161
    %s178 = sphi 0, %s162
  $region4: #{fast_rcnn_forward.1} parent=0 // loop_header_branch
    %15 = sbr.rel (%p13) target = $region8
  $region5: #{fast_rcnn_forward.1} parent=0 // loop_body
    %s17 = ssub.s32 %s12, 1
    %s18 = ssub.s32 %s12, 2
    %s19 = sadd.s32 %s12, 1
    %s20 = ssub.s32 %s12, %s19
    %p21 = scmp.eq.s32.totalorder %s20, 0
    %s23 = sadd.s32 %s22, 1
    %s24 = scalar_select %p21, %s22, %s23
    %p27 = pneg %p21
    %p28 = scmp.eq.s32.totalorder %s12, 1
    %p29 = por %p27, %p28
    %p30 = scmp.ne.s32.totalorder %s22, %s25
    %p31 = scmp.eq.s32.totalorder %s12, 0
    %p32 = por %p30, %p31
    %p33 = scmp.ne.s32.totalorder %s22, %s25
    %p34 = scmp.eq.s32.totalorder %s17, 1
    %p35 = por %p33, %p34
    %p36 = scmp.ne.s32.totalorder %s25, %s26
    %p37 = scmp.eq.s32.totalorder %s17, 0
    %p38 = por %p36, %p37
    %p39 = scmp.ne.s32.totalorder %s25, %s26
    %p40 = scmp.eq.s32.totalorder %s18, 1
    %p41 = por %p39, %p40
    %p43 = scmp.ne.s32.totalorder %s26, %s42
    %p44 = scmp.eq.s32.totalorder %s18, 0
    %p45 = por %p43, %p44
    %s46 = ssub.s32 %s12, %s19
    %p47 = scmp.eq.s32.totalorder %s46, 0
    %s49 = sadd.s32 %s48, 1
    %s50 = scalar_select %p47, %s48, %s49
    %p53 = pneg %p47
    %p54 = scmp.eq.s32.totalorder %s12, 1
    %p55 = por %p53, %p54
    %p56 = scmp.ne.s32.totalorder %s48, %s51
    %p57 = scmp.eq.s32.totalorder %s12, 0
    %p58 = por %p56, %p57
    %p59 = scmp.ne.s32.totalorder %s48, %s51
    %p60 = scmp.eq.s32.totalorder %s17, 1
    %p61 = por %p59, %p60
    %p62 = scmp.ne.s32.totalorder %s51, %s52
    %p63 = scmp.eq.s32.totalorder %s17, 0
    %p64 = por %p62, %p63
    %p65 = scmp.ne.s32.totalorder %s51, %s52
    %p66 = scmp.eq.s32.totalorder %s18, 1
    %p67 = por %p65, %p66
    %p69 = scmp.ne.s32.totalorder %s52, %s68
    %p70 = scmp.eq.s32.totalorder %s18, 0
    %p71 = por %p69, %p70
    %s73 = sadd.s32 %s72, 1
    %p76 = scmp.eq.s32.totalorder %s12, 1
    %p77 = scmp.ne.s32.totalorder %s72, %s74
    %p78 = scmp.eq.s32.totalorder %s12, 0
    %p79 = por %p77, %p78
    %p80 = scmp.ne.s32.totalorder %s72, %s74
    %p81 = scmp.eq.s32.totalorder %s17, 1
    %p82 = por %p80, %p81
    %p83 = scmp.ne.s32.totalorder %s74, %s75
    %p84 = scmp.eq.s32.totalorder %s17, 0
    %p85 = por %p83, %p84
    %p86 = scmp.ne.s32.totalorder %s74, %s75
    %p87 = scmp.eq.s32.totalorder %s18, 1
    %p88 = por %p86, %p87
    %p90 = scmp.ne.s32.totalorder %s75, %s89
    %p91 = scmp.eq.s32.totalorder %s18, 0
    %p92 = por %p90, %p91
    %s94 = sadd.s32 %s93, 1
    %p97 = scmp.eq.s32.totalorder %s12, 1
    %p98 = scmp.ne.s32.totalorder %s93, %s95
    %p99 = scmp.eq.s32.totalorder %s12, 0
    %p100 = por %p98, %p99
    %p101 = scmp.ne.s32.totalorder %s93, %s95
    %p102 = scmp.eq.s32.totalorder %s17, 1
    %p103 = por %p101, %p102
    %p104 = scmp.ne.s32.totalorder %s95, %s96
    %p105 = scmp.eq.s32.totalorder %s17, 0
    %p106 = por %p104, %p105
    %p107 = scmp.ne.s32.totalorder %s95, %s96
    %p108 = scmp.eq.s32.totalorder %s18, 1
    %p109 = por %p107, %p108
    %p111 = scmp.ne.s32.totalorder %s96, %s110
    %p112 = scmp.eq.s32.totalorder %s18, 0
    %p113 = por %p111, %p112
    %s115 = sadd.s32 %s114, 1
    %p118 = scmp.eq.s32.totalorder %s12, 1
    %p119 = scmp.ne.s32.totalorder %s114, %s116
    %p120 = scmp.eq.s32.totalorder %s12, 0
    %p121 = por %p119, %p120
    %p122 = scmp.ne.s32.totalorder %s114, %s116
    %p123 = scmp.eq.s32.totalorder %s17, 1
    %p124 = por %p122, %p123
    %p125 = scmp.ne.s32.totalorder %s116, %s117
    %p126 = scmp.eq.s32.totalorder %s17, 0
    %p127 = por %p125, %p126
    %p128 = scmp.ne.s32.totalorder %s116, %s117
    %p129 = scmp.eq.s32.totalorder %s18, 1
    %p130 = por %p128, %p129
    %p132 = scmp.ne.s32.totalorder %s117, %s131
    %p133 = scmp.eq.s32.totalorder %s18, 0
    %p134 = por %p132, %p133
    %s136 = sadd.s32 %s135, 1
    %p139 = scmp.eq.s32.totalorder %s12, 1
    %p140 = scmp.ne.s32.totalorder %s135, %s137
    %p141 = scmp.eq.s32.totalorder %s12, 0
    %p142 = por %p140, %p141
    %p143 = scmp.ne.s32.totalorder %s135, %s137
    %p144 = scmp.eq.s32.totalorder %s17, 1
    %p145 = por %p143, %p144
    %p146 = scmp.ne.s32.totalorder %s137, %s138
    %p147 = scmp.eq.s32.totalorder %s17, 0
    %p148 = por %p146, %p147
    %p149 = scmp.ne.s32.totalorder %s137, %s138
    %p150 = scmp.eq.s32.totalorder %s18, 1
    %p151 = por %p149, %p150
    %p153 = scmp.ne.s32.totalorder %s138, %s152
    %p154 = scmp.eq.s32.totalorder %s18, 0
    %p155 = por %p153, %p154
    %s156 = ssub.s32 %s12, %s19
    %p157 = scmp.eq.s32.totalorder %s156, 0
    %s159 = sadd.s32 %s158, 1
    %s160 = scalar_select %p157, %s158, %s159
    %p163 = pneg %p157
    %p164 = scmp.eq.s32.totalorder %s12, 1
    %p165 = por %p163, %p164
    %p166 = scmp.ne.s32.totalorder %s158, %s161
    %p167 = scmp.eq.s32.totalorder %s12, 0
    %p168 = por %p166, %p167
    %p169 = scmp.ne.s32.totalorder %s158, %s161
    %p170 = scmp.eq.s32.totalorder %s17, 1
    %p171 = por %p169, %p170
    %p172 = scmp.ne.s32.totalorder %s161, %s162
    %p173 = scmp.eq.s32.totalorder %s17, 0
    %p174 = por %p172, %p173
    %p175 = scmp.ne.s32.totalorder %s161, %s162
    %p176 = scmp.eq.s32.totalorder %s18, 1
    %p177 = por %p175, %p176
    %p179 = scmp.ne.s32.totalorder %s162, %s178
    %p180 = scmp.eq.s32.totalorder %s18, 0
    %p181 = por %p179, %p180
    %p182 = scmp.le.s32.totalorder 1, %s12
    %p183 = scmp.lt.s32.totalorder %s12, 3
    %p184 = pnand %p182, %p183
    %p185 = pneg %p184
    // Predicated region
    $region9: #{fast_rcnn_forward.1} parent=5 // pred_check
      _
    $region10: #{fast_rcnn_forward.1} parent=5 // pred_check_branch
      %187 = sbr.rel (%p184) target = $region12
    $region11: #{fast_rcnn_forward.1} parent=5 // pred_region
      %s188 = ssub.s32 %s12, 1
      // Predicated region
      $region13: #{fast_rcnn_forward.1} parent=11 // pred_check
        %p189 = pneg %p85
      $region14: #{fast_rcnn_forward.1} parent=11 // pred_check_branch
        %191 = sbr.rel (%p189) target = $region16
      $region15: #{fast_rcnn_forward.1} parent=11 // pred_region
        _
      $region16: #{fast_rcnn_forward.1} parent=11 // pred_fallthru
        _
      // Predicated region
      $region17: #{fast_rcnn_forward.1} parent=11 // pred_check
        %p192 = pneg %p106
      $region18: #{fast_rcnn_forward.1} parent=11 // pred_check_branch
        %194 = sbr.rel (%p192) target = $region20
      $region19: #{fast_rcnn_forward.1} parent=11 // pred_region
        _
      $region20: #{fast_rcnn_forward.1} parent=11 // pred_fallthru
        _
      // Predicated region
      $region21: #{fast_rcnn_forward.1} parent=11 // pred_check
        %p195 = pneg %p127
      $region22: #{fast_rcnn_forward.1} parent=11 // pred_check_branch
        %197 = sbr.rel (%p195) target = $region24
      $region23: #{fast_rcnn_forward.1} parent=11 // pred_region
        _
      $region24: #{fast_rcnn_forward.1} parent=11 // pred_fallthru
        _
      // Predicated region
      $region25: #{fast_rcnn_forward.1} parent=11 // pred_check
        %p198 = pneg %p148
      $region26: #{fast_rcnn_forward.1} parent=11 // pred_check_branch
        %200 = sbr.rel (%p198) target = $region28
      $region27: #{fast_rcnn_forward.1} parent=11 // pred_region
        _
      $region28: #{fast_rcnn_forward.1} parent=11 // pred_fallthru
        _
    $region12: #{fast_rcnn_forward.1} parent=5 // pred_fallthru
      _
    %p201 = scmp.lt.s32.totalorder %s12, 2
    // Predicated region
    $region29: #{fast_rcnn_forward.1} parent=5 // pred_check
      %p202 = pneg %p201
    $region30: #{fast_rcnn_forward.1} parent=5 // pred_check_branch
      %204 = sbr.rel (%p202) target = $region32
    $region31: #{fast_rcnn_forward.1} parent=5 // pred_region
      // Predicated region
      $region33: #{fast_rcnn_forward.1} parent=31 // pred_check
        %p205 = pneg %p32
      $region34: #{fast_rcnn_forward.1} parent=31 // pred_check_branch
        %207 = sbr.rel (%p205) target = $region36
      $region35: #{fast_rcnn_forward.1} parent=31 // pred_region
        %p208 = scmp.lt.s32.totalorder %s12, 1
        %s209 = scalar_select %p208, %s12, 1
        %s210 = smul.addr %s209, 8
        %s211 = scalar_lea.vmem %s0, %s210
      $region36: #{fast_rcnn_forward.1} parent=31 // pred_fallthru
        _
      // Predicated region
      $region37: #{fast_rcnn_forward.1} parent=31 // pred_check
        %p212 = pneg %p58
      $region38: #{fast_rcnn_forward.1} parent=31 // pred_check_branch
        %214 = sbr.rel (%p212) target = $region40
      $region39: #{fast_rcnn_forward.1} parent=31 // pred_region
        %p215 = scmp.lt.s32.totalorder %s12, 1
        %s216 = scalar_select %p215, %s12, 1
        %s217 = smul.addr %s216, 2
        %s218 = smul.addr %s217, 4
        %s219 = scalar_lea.vmem %s1, %s218
      $region40: #{fast_rcnn_forward.1} parent=31 // pred_fallthru
        _
    $region32: #{fast_rcnn_forward.1} parent=5 // pred_fallthru
      _
    %p220 = scmp.le.s32.totalorder 1, %s12
    %p221 = scmp.lt.s32.totalorder %s12, 3
    %p222 = pnand %p220, %p221
    %p223 = pneg %p222
    // Predicated region
    $region41: #{fast_rcnn_forward.1} parent=5 // pred_check
      _
    $region42: #{fast_rcnn_forward.1} parent=5 // pred_check_branch
      %225 = sbr.rel (%p222) target = $region44
    $region43: #{fast_rcnn_forward.1} parent=5 // pred_region
      %s226 = ssub.s32 %s12, 1
      %p227 = scmp.lt.s32.totalorder %s17, 1
      %s228 = scalar_select %p227, %s17, 1
      %s229 = smul.addr %s228, 8
      %s230 = scalar_lea.vmem %s0, %s229
      %p231 = pneg %p38
      %p232 = pneg %p35
      %p233 = scmp.lt.s32.totalorder %s17, 1
      %s234 = scalar_select %p233, %s17, 1
      %s235 = smul.addr %s234, 2
      %s236 = smul.addr %s235, 4
      %s237 = scalar_lea.vmem %s1, %s236
      %p238 = pneg %p64
      %p239 = pneg %p61
      %p240 = pneg %p85
      %p241 = pneg %p82
      %p242 = pneg %p106
      %p243 = pneg %p103
      %p244 = pneg %p127
      %p245 = pneg %p124
      %p246 = pneg %p148
      %p247 = pneg %p145
      %p248 = pneg %p174
      %p249 = pneg %p171
      %p250 = scmp.lt.s32.totalorder %s17, 1
      %s251 = scalar_select %p250, %s17, 1
      %s252 = smul.addr %s251, 4
      %s253 = scalar_lea.vmem %s6, %s252
      %p254 = scmp.lt.s32.totalorder %s17, 1
      %s255 = scalar_select %p254, %s17, 1
      %s256 = smul.addr %s255, 8
      %s257 = scalar_lea.vmem %s0, %s256
      %p258 = scmp.lt.s32.totalorder %s17, 1
      %s259 = scalar_select %p258, %s17, 1
      %s260 = smul.addr %s259, 2
      %s261 = smul.addr %s260, 4
      %s262 = scalar_lea.vmem %s1, %s261
      %p263 = scmp.lt.s32.totalorder %s17, 1
      %s264 = scalar_select %p263, %s17, 1
      %s265 = smul.addr %s264, 4
      %s266 = scalar_lea.vmem %s6, %s265
      %v268 = vld [vmem:[%s257] sm:$0xff]
      %v269 = vld [vmem:[%s2] sm:$0xff]
      %vm270 = vcmask 64512
      %v272 = vsel %vm270, %v268, 0
      %274 = vmatprep.subr.mxu0 0.0
      %275 = vmatpush1.msra.mxu0 %v269
      %276 = vmatprep.subr.mxu0 0.0
      %277 = vmatpush1.msra.mxu0 0.0
      %278 = vmatprep.subr.mxu0 0.0
      %279 = vmatpush1.msra.mxu0 0.0
      %280 = vmatprep.subr.mxu0 0.0
      %281 = vmatpush1.msra.mxu0 0.0
      %282 = vmatprep.subr.mxu0 0.0
      %283 = vmatpush1.msra.mxu0 0.0
      %284 = vmatprep.subr.mxu0 0.0
      %285 = vmatpush1.msra.mxu0 0.0
      %286 = vmatprep.subr.mxu0 0.0
      %287 = vmatpush1.msra.mxu0 0.0
      %288 = vmatprep.subr.mxu0 0.0
      %289 = vmatpush1.msra.mxu0 0.0
      %290 = vmatprep.subr.mxu0 0.0
      %291 = vmatpush1.msra.mxu0 0.0
      %292 = vmatprep.subr.mxu0 0.0
      %293 = vmatpush1.msra.mxu0 0.0
      %294 = vmatprep.subr.mxu0 0.0
      %295 = vmatpush1.msra.mxu0 0.0
      %296 = vmatprep.subr.mxu0 0.0
      %297 = vmatpush1.msra.mxu0 0.0
      %298 = vmatprep.subr.mxu0 0.0
      %299 = vmatpush1.msra.mxu0 0.0
      %300 = vmatprep.subr.mxu0 0.0
      %301 = vmatpush1.msra.mxu0 0.0
      %302 = vmatprep.subr.mxu0 0.0
      %303 = vmatpush1.msra.mxu0 0.0
      %304 = vmatprep.subr.mxu0 0.0
      %305 = vmatpush1.msra.mxu0 0.0
      %306 = vmatprep.subr.mxu0 0.0
      %307 = vmatpush1.msra.mxu0 0.0
      %308 = vmatprep.subr.mxu0 0.0
      %309 = vmatpush1.msra.mxu0 0.0
      %310 = vmatprep.subr.mxu0 0.0
      %311 = vmatpush1.msra.mxu0 0.0
      %312 = vmatprep.subr.mxu0 0.0
      %313 = vmatpush1.msra.mxu0 0.0
      %314 = vmatprep.subr.mxu0 0.0
      %315 = vmatpush1.msra.mxu0 0.0
      %316 = vmatprep.subr.mxu0 0.0
      %317 = vmatpush1.msra.mxu0 0.0
      %318 = vmatprep.subr.mxu0 0.0
      %319 = vmatpush1.msra.mxu0 0.0
      %320 = vmatprep.subr.mxu0 0.0
      %321 = vmatpush1.msra.mxu0 0.0
      %322 = vmatprep.subr.mxu0 0.0
      %323 = vmatpush1.msra.mxu0 0.0
      %324 = vmatprep.subr.mxu0 0.0
      %325 = vmatpush1.msra.mxu0 0.0
      %326 = vmatprep.subr.mxu0 0.0
      %327 = vmatpush1.msra.mxu0 0.0
      %328 = vmatprep.subr.mxu0 0.0
      %329 = vmatpush1.msra.mxu0 0.0
      %330 = vmatprep.subr.mxu0 0.0
      %331 = vmatpush1.msra.mxu0 0.0
      %332 = vmatprep.subr.mxu0 0.0
      %333 = vmatpush1.msra.mxu0 0.0
      %334 = vmatprep.subr.mxu0 0.0
      %335 = vmatpush1.msra.mxu0 0.0
      %336 = vmatprep.subr.mxu0 0.0
      %337 = vmatpush1.msra.mxu0 0.0
      %338 = vmatprep.mubr.f32.mxu0 0.0
      %339 = vmatmul.mubr.f32.gmra.mrb[0].mxu0 %v272
      %v340 = vpop.f32.mrb[0].mxu0
      %v341 = vadd.f32 0.0, %v340
      %v342 = vpop.f32.mrb[0].mxu0
      %343 = vdwg.mxu0
      %v344 = vand.u32 2147483647, %v341
      %vm345 = vcmp.le.f32.partialorder %v344, 0.7853982
      %vm346 = vcmp.lt.s32.totalorder %v341, 0
      %v347 = vand.u32 %v341, 2139095040
      %v348 = vshrl.u32 %v347, 23
      %v349 = vsub.s32 %v348, 127
      %v350 = vand.u32 2147483647, %v341
      %v351 = vand.u32 %v350, 8388607
      %v352 = vor.u32 %v351, 8388608
      %v353 = vsub.s32 0, %v352
      %v354 = vadd.s32 %v349, 1
      %vm355 = vcmp.gt.s32.totalorder %v354, 0
      %v356 = vsel %vm355, %v354, 0
      %v357 = vshrl.u32 %v356, 5
      %v358 = vand.u32 %v356, 31
      %v359 = vsub.s32 32, %v358
      %v360 = vshrl.u32 683565275, %v359
      %v361 = vshll.u32 683565275, %v358
      %v362 = vshrl.u32 2475754826, %v359
      %v363 = vor.u32 %v361, %v362
      %v364 = vshll.u32 2475754826, %v358
      %v365 = vshrl.u32 2131351028, %v359
      %v366 = vor.u32 %v364, %v365
      %v367 = vshll.u32 2131351028, %v358
      %v368 = vshrl.u32 2102212464, %v359
      %v369 = vor.u32 %v367, %v368
      %v370 = vshll.u32 2102212464, %v358
      %v371 = vshrl.u32 920167782, %v359
      %v372 = vor.u32 %v370, %v371
      %v373 = vshll.u32 920167782, %v358
      %v374 = vshrl.u32 1326507024, %v359
      %v375 = vor.u32 %v373, %v374
      %vm376 = vcmp.lt.s32.totalorder %v357, 1
      %vm377 = vcmp.lt.s32.totalorder %v357, 2
      %vm378 = vcmp.lt.s32.totalorder %v357, 3
      %vm379 = vcmp.lt.s32.totalorder %v357, 4
      %v380 = vsel %vm376, %v360, %v363
      %v381 = vsel %vm379, %v369, 2102212464
      %v382 = vsel %vm378, %v366, %v381
      %v383 = vsel %vm377, %v380, %v382
      %v384 = vsel %vm376, %v363, %v366
      %v385 = vsel %vm379, %v372, 920167782
      %v386 = vsel %vm378, %v369, %v385
      %v387 = vsel %vm377, %v384, %v386
      %v388 = vsel %vm376, %v366, %v369
      %v389 = vsel %vm379, %v375, 1326507024
      %v390 = vsel %vm378, %v372, %v389
      %v391 = vsel %vm377, %v388, %v390
      %v392 = vshll.u32 %v352, 8
      %v393 = vmul.u32.u64.compose %v392, %v391
      %v394 = vextract.low.u32 %v393
      %v395 = vextract.high.u32 %v393
      %v396 = vmul.u32.u64.compose %v392, %v387
      %v397 = vextract.low.u32 %v396
      %v398 = vextract.high.u32 %v396
      %v399 = vmul.u32 %v392, %v383
      %v400 = vadd.s32 %v395, %v397
      %vm401 = vc.u32 %v395, %v397
      %v402 = vadd.s32 %v398, 1
      %v403 = vsel %vm401, %v402, %v398
      %v404 = vadd.s32 %v399, %v403
      %v405 = vadd.s32 %v404, 536870912
      %v406 = vshrl.u32 %v405, 30
      %v407 = vshll.u32 %v406, 30
      %v408 = vsub.s32 %v404, %v407
      %vm409 = vcmp.lt.s32.totalorder %v408, 0
      %v410 = vsub.s32 0, %v408
      %v411 = vsel %vm409, %v410, %v408
      %v412 = vclz %v411
      %v413 = vsub.s32 %v412, 2
      %vm414 = vcmp.gt.s32.totalorder 0, %v413
      %v415 = vsel %vm414, 0, %v413
      %v416 = vsub.s32 32, %v415
      %v417 = vshll.u32 %v408, %v415
      %v418 = vshrl.u32 %v400, %v416
      %v419 = vor.u32 %v417, %v418
      %v420 = vsub.s32 4294967266, %v415
      %v421 = vadd.s32 %v420, 127
      %v422 = vshll.u32 %v421, 23
      %v423 = vor.u32 4788187, %v422
      %v424 = vand.u32 2147483647, %v423
      %v426 = vcvt.s32.f32 %v419
      %v427 = vmul.f32 %v426, %v424
      %v428 = vxor.u32 %v427, 2147483648
      %v429 = vsel %vm346, %v428, %v427
      %v430 = vsub.s32 4, %v406
      %v431 = vsel %vm346, %v430, %v406
      %v432 = vsel %vm345, %v341, %v429
      %v433 = vsel %vm345, 0, %v431
      %v434 = vcosq.f32.pop %v432
      %v435 = vsinq.f32.pop %v432
      %vm436 = vweird.f32 %v341
      %v437 = vadd.s32 %v433, 3
      %v438 = vand.u32 %v437, 3
      %vm439 = vcmp.lt.s32.totalorder %v438, 2
      %vm440 = vcmp.eq.s32.totalorder %v438, 0
      %v441 = vxor.u32 %v435, 2147483648
      %v442 = vsel %vm440, %v434, %v441
      %vm443 = vcmp.eq.s32.totalorder %v438, 2
      %v444 = vxor.u32 %v434, 2147483648
      %v445 = vsel %vm443, %v444, %v435
      %v446 = vsel %vm439, %v442, %v445
      %v447 = vsel %vm436, nan, %v446
      %v448 = vpack.c.bf16 %v447, %v447
      %449 = vst [vmem:[#allocation2] sm:$0xf] %v448
      %v450 = vand.u32 2147483647, %v341
      %vm451 = vcmp.le.f32.partialorder %v450, 0.7853982
      %vm452 = vcmp.lt.s32.totalorder %v341, 0
      %v453 = vand.u32 %v341, 2139095040
      %v454 = vshrl.u32 %v453, 23
      %v455 = vsub.s32 %v454, 127
      %v456 = vand.u32 2147483647, %v341
      %v457 = vand.u32 %v456, 8388607
      %v458 = vor.u32 %v457, 8388608
      %v459 = vsub.s32 0, %v458
      %v460 = vadd.s32 %v455, 1
      %vm461 = vcmp.gt.s32.totalorder %v460, 0
      %v462 = vsel %vm461, %v460, 0
      %v463 = vshrl.u32 %v462, 5
      %v464 = vand.u32 %v462, 31
      %v465 = vsub.s32 32, %v464
      %v466 = vshrl.u32 683565275, %v465
      %v467 = vshll.u32 683565275, %v464
      %v468 = vshrl.u32 2475754826, %v465
      %v469 = vor.u32 %v467, %v468
      %v470 = vshll.u32 2475754826, %v464
      %v471 = vshrl.u32 2131351028, %v465
      %v472 = vor.u32 %v470, %v471
      %v473 = vshll.u32 2131351028, %v464
      %v474 = vshrl.u32 2102212464, %v465
      %v475 = vor.u32 %v473, %v474
      %v476 = vshll.u32 2102212464, %v464
      %v477 = vshrl.u32 920167782, %v465
      %v478 = vor.u32 %v476, %v477
      %v479 = vshll.u32 920167782, %v464
      %v480 = vshrl.u32 1326507024, %v465
      %v481 = vor.u32 %v479, %v480
      %vm482 = vcmp.lt.s32.totalorder %v463, 1
      %vm483 = vcmp.lt.s32.totalorder %v463, 2
      %vm484 = vcmp.lt.s32.totalorder %v463, 3
      %vm485 = vcmp.lt.s32.totalorder %v463, 4
      %v486 = vsel %vm482, %v466, %v469
      %v487 = vsel %vm485, %v475, 2102212464
      %v488 = vsel %vm484, %v472, %v487
      %v489 = vsel %vm483, %v486, %v488
      %v490 = vsel %vm482, %v469, %v472
      %v491 = vsel %vm485, %v478, 920167782
      %v492 = vsel %vm484, %v475, %v491
      %v493 = vsel %vm483, %v490, %v492
      %v494 = vsel %vm482, %v472, %v475
      %v495 = vsel %vm485, %v481, 1326507024
      %v496 = vsel %vm484, %v478, %v495
      %v497 = vsel %vm483, %v494, %v496
      %v498 = vshll.u32 %v458, 8
      %v499 = vmul.u32.u64.compose %v498, %v497
      %v500 = vextract.low.u32 %v499
      %v501 = vextract.high.u32 %v499
      %v502 = vmul.u32.u64.compose %v498, %v493
      %v503 = vextract.low.u32 %v502
      %v504 = vextract.high.u32 %v502
      %v505 = vmul.u32 %v498, %v489
      %v506 = vadd.s32 %v501, %v503
      %vm507 = vc.u32 %v501, %v503
      %v508 = vadd.s32 %v504, 1
      %v509 = vsel %vm507, %v508, %v504
      %v510 = vadd.s32 %v505, %v509
      %v511 = vadd.s32 %v510, 536870912
      %v512 = vshrl.u32 %v511, 30
      %v513 = vshll.u32 %v512, 30
      %v514 = vsub.s32 %v510, %v513
      %vm515 = vcmp.lt.s32.totalorder %v514, 0
      %v516 = vsub.s32 0, %v514
      %v517 = vsel %vm515, %v516, %v514
      %v518 = vclz %v517
      %v519 = vsub.s32 %v518, 2
      %vm520 = vcmp.gt.s32.totalorder 0, %v519
      %v521 = vsel %vm520, 0, %v519
      %v522 = vsub.s32 32, %v521
      %v523 = vshll.u32 %v514, %v521
      %v524 = vshrl.u32 %v506, %v522
      %v525 = vor.u32 %v523, %v524
      %v526 = vsub.s32 4294967266, %v521
      %v527 = vadd.s32 %v526, 127
      %v528 = vshll.u32 %v527, 23
      %v529 = vor.u32 4788187, %v528
      %v530 = vand.u32 2147483647, %v529
      %v532 = vcvt.s32.f32 %v525
      %v533 = vmul.f32 %v532, %v530
      %v534 = vxor.u32 %v533, 2147483648
      %v535 = vsel %vm452, %v534, %v533
      %v536 = vsub.s32 4, %v512
      %v537 = vsel %vm452, %v536, %v512
      %v538 = vsel %vm451, %v341, %v535
      %v539 = vsel %vm451, 0, %v537
      %v540 = vcosq.f32.pop %v538
      %v541 = vsinq.f32.pop %v538
      %vm542 = vweird.f32 %v341
      %v543 = vand.u32 %v539, 3
      %vm544 = vcmp.lt.s32.totalorder %v543, 2
      %vm545 = vcmp.eq.s32.totalorder %v543, 0
      %v546 = vxor.u32 %v541, 2147483648
      %v547 = vsel %vm545, %v540, %v546
      %vm548 = vcmp.eq.s32.totalorder %v543, 2
      %v549 = vxor.u32 %v540, 2147483648
      %v550 = vsel %vm548, %v549, %v541
      %v551 = vsel %vm544, %v547, %v550
      %v552 = vsel %vm542, nan, %v551
      %v553 = vpack.c.bf16 %v552, %v552
      %554 = vst [vmem:[#allocation2 + $0x4] sm:$0xf] %v553
      %v555 = vld [vmem:[#allocation2] sm:$0xff]
      %v556 = vld [vmem:[%s3] sm:$0xf]
      %v557 = vld [vmem:[%s3 + $0x4] sm:$0xf]
      %v558 = vld [vmem:[%s3 + $0x8] sm:$0xf]
      %v559 = vld [vmem:[%s3 + $0xc] sm:$0xf]
      %v560 = vld [vmem:[%s3 + $0x10] sm:$0xf]
      %v561 = vld [vmem:[%s3 + $0x14] sm:$0xf]
      %v562 = vld [vmem:[%s3 + $0x18] sm:$0xf]
      %v563 = vld [vmem:[%s3 + $0x1c] sm:$0xf]
      %v564 = vld [vmem:[%s3 + $0x20] sm:$0xf]
      %v565 = vld [vmem:[%s3 + $0x24] sm:$0xf]
      %v566 = vld [vmem:[%s3 + $0x28] sm:$0xf]
      %v567 = vld [vmem:[%s3 + $0x2c] sm:$0xf]
      %v568 = vld [vmem:[%s3 + $0x30] sm:$0xf]
      %v569 = vld [vmem:[%s3 + $0x34] sm:$0xf]
      %v570 = vld [vmem:[%s3 + $0x38] sm:$0xf]
      %v571 = vld [vmem:[%s3 + $0x3c] sm:$0xf]
      %v572 = vld [vmem:[%s3 + $0x40] sm:$0xf]
      %v573 = vld [vmem:[%s3 + $0x44] sm:$0xf]
      %v574 = vld [vmem:[%s3 + $0x48] sm:$0xf]
      %v575 = vld [vmem:[%s3 + $0x4c] sm:$0xf]
      %v576 = vld [vmem:[%s3 + $0x50] sm:$0xf]
      %v577 = vld [vmem:[%s3 + $0x54] sm:$0xf]
      %v578 = vld [vmem:[%s3 + $0x58] sm:$0xf]
      %v579 = vld [vmem:[%s3 + $0x5c] sm:$0xf]
      %v580 = vld [vmem:[%s3 + $0x60] sm:$0xf]
      %v581 = vld [vmem:[%s3 + $0x64] sm:$0xf]
      %v582 = vld [vmem:[%s3 + $0x68] sm:$0xf]
      %v583 = vld [vmem:[%s3 + $0x6c] sm:$0xf]
      %v584 = vld [vmem:[%s3 + $0x70] sm:$0xf]
      %v585 = vld [vmem:[%s3 + $0x74] sm:$0xf]
      %v586 = vld [vmem:[%s3 + $0x78] sm:$0xf]
      %v587 = vld [vmem:[%s3 + $0x7c] sm:$0xf]
      %v588 = vld [vmem:[%s262] sm:$0xff]
      %v589 = vld [vmem:[%s4] sm:$0xf]
      %v590 = vld [vmem:[%s4 + $0x4] sm:$0xf]
      %v591 = vld [vmem:[%s4 + $0x8] sm:$0xf]
      %v592 = vld [vmem:[%s4 + $0xc] sm:$0xf]
      %v593 = vld [vmem:[%s4 + $0x10] sm:$0xf]
      %v594 = vld [vmem:[%s4 + $0x14] sm:$0xf]
      %v595 = vld [vmem:[%s4 + $0x18] sm:$0xf]
      %v596 = vld [vmem:[%s4 + $0x1c] sm:$0xf]
      %v597 = vld [vmem:[%s4 + $0x20] sm:$0xf]
      %v598 = vld [vmem:[%s4 + $0x24] sm:$0xf]
      %v599 = vld [vmem:[%s4 + $0x28] sm:$0xf]
      %v600 = vld [vmem:[%s4 + $0x2c] sm:$0xf]
      %v601 = vld [vmem:[%s4 + $0x30] sm:$0xf]
      %v602 = vld [vmem:[%s4 + $0x34] sm:$0xf]
      %v603 = vld [vmem:[%s4 + $0x38] sm:$0xf]
      %v604 = vld [vmem:[%s4 + $0x3c] sm:$0xf]
      %v605 = vld [vmem:[%s4 + $0x40] sm:$0xf]
      %v606 = vld [vmem:[%s4 + $0x44] sm:$0xf]
      %v607 = vld [vmem:[%s4 + $0x48] sm:$0xf]
      %v608 = vld [vmem:[%s4 + $0x4c] sm:$0xf]
      %v609 = vld [vmem:[%s4 + $0x50] sm:$0xf]
      %v610 = vld [vmem:[%s4 + $0x54] sm:$0xf]
      %v611 = vld [vmem:[%s4 + $0x58] sm:$0xf]
      %v612 = vld [vmem:[%s4 + $0x5c] sm:$0xf]
      %v613 = vld [vmem:[%s4 + $0x60] sm:$0xf]
      %v614 = vld [vmem:[%s4 + $0x64] sm:$0xf]
      %v615 = vld [vmem:[%s4 + $0x68] sm:$0xf]
      %v616 = vld [vmem:[%s4 + $0x6c] sm:$0xf]
      %v617 = vld [vmem:[%s4 + $0x70] sm:$0xf]
      %v618 = vld [vmem:[%s4 + $0x74] sm:$0xf]
      %v619 = vld [vmem:[%s4 + $0x78] sm:$0xf]
      %v620 = vld [vmem:[%s4 + $0x7c] sm:$0xf]
      %v622 = vunpack.c.l.b16 %v588
      %v623 = vunpack.c.h.b16 %v588
      %v624 = vpack.c.b16 %v622, %v622
      %v625 = vpack.c.b16 %v623, %v623
      %v660 = vunpack.c.l.b16 %v589
      %v661 = vunpack.c.l.b16 %v590
      %v662 = vunpack.c.l.b16 %v591
      %v663 = vunpack.c.l.b16 %v592
      %v664 = vunpack.c.l.b16 %v593
      %v665 = vunpack.c.l.b16 %v594
      %v666 = vunpack.c.l.b16 %v595
      %v667 = vunpack.c.l.b16 %v596
      %v668 = vunpack.c.l.b16 %v597
      %v669 = vunpack.c.l.b16 %v598
      %v670 = vunpack.c.l.b16 %v599
      %v671 = vunpack.c.l.b16 %v600
      %v672 = vunpack.c.l.b16 %v601
      %v673 = vunpack.c.l.b16 %v602
      %v674 = vunpack.c.l.b16 %v603
      %v675 = vunpack.c.l.b16 %v604
      %v676 = vunpack.c.l.b16 %v605
      %v677 = vunpack.c.l.b16 %v606
      %v678 = vunpack.c.l.b16 %v607
      %v679 = vunpack.c.l.b16 %v608
      %v680 = vunpack.c.l.b16 %v609
      %v681 = vunpack.c.l.b16 %v610
      %v682 = vunpack.c.l.b16 %v611
      %v683 = vunpack.c.l.b16 %v612
      %v684 = vunpack.c.l.b16 %v613
      %v685 = vunpack.c.l.b16 %v614
      %v686 = vunpack.c.l.b16 %v615
      %v687 = vunpack.c.l.b16 %v616
      %v688 = vunpack.c.l.b16 %v617
      %v689 = vunpack.c.l.b16 %v618
      %v690 = vunpack.c.l.b16 %v619
      %v691 = vunpack.c.l.b16 %v620
      %v692 = vpack.c.b16 %v661, %v660
      %v693 = vpack.c.b16 %v663, %v662
      %v694 = vpack.c.b16 %v665, %v664
      %v695 = vpack.c.b16 %v667, %v666
      %v696 = vpack.c.b16 %v669, %v668
      %v697 = vpack.c.b16 %v671, %v670
      %v698 = vpack.c.b16 %v673, %v672
      %v699 = vpack.c.b16 %v675, %v674
      %v700 = vpack.c.b16 %v677, %v676
      %v701 = vpack.c.b16 %v679, %v678
      %v702 = vpack.c.b16 %v681, %v680
      %v703 = vpack.c.b16 %v683, %v682
      %v704 = vpack.c.b16 %v685, %v684
      %v705 = vpack.c.b16 %v687, %v686
      %v706 = vpack.c.b16 %v689, %v688
      %v707 = vpack.c.b16 %v691, %v690
      %724 = vmatprep.subr.bf16.mxu0 0
      %725 = vmatpush1.bf16.msra.mxu0 %v692
      %726 = vmatprep.subr.bf16.mxu0 0
      %727 = vmatpush1.bf16.msra.mxu0 %v693
      %728 = vmatprep.subr.bf16.mxu0 0
      %729 = vmatpush1.bf16.msra.mxu0 %v694
      %730 = vmatprep.subr.bf16.mxu0 0
      %731 = vmatpush1.bf16.msra.mxu0 %v695
      %732 = vmatprep.subr.bf16.mxu0 0
      %733 = vmatpush1.bf16.msra.mxu0 %v696
      %734 = vmatprep.subr.bf16.mxu0 0
      %735 = vmatpush1.bf16.msra.mxu0 %v697
      %736 = vmatprep.subr.bf16.mxu0 0
      %737 = vmatpush1.bf16.msra.mxu0 %v698
      %738 = vmatprep.subr.bf16.mxu0 0
      %739 = vmatpush1.bf16.msra.mxu0 %v699
      %740 = vmatprep.subr.bf16.mxu0 0
      %741 = vmatpush1.bf16.msra.mxu0 %v700
      %742 = vmatprep.subr.bf16.mxu0 0
      %743 = vmatpush1.bf16.msra.mxu0 %v701
      %744 = vmatprep.subr.bf16.mxu0 0
      %745 = vmatpush1.bf16.msra.mxu0 %v702
      %746 = vmatprep.subr.bf16.mxu0 0
      %747 = vmatpush1.bf16.msra.mxu0 %v703
      %748 = vmatprep.subr.bf16.mxu0 0
      %749 = vmatpush1.bf16.msra.mxu0 %v704
      %750 = vmatprep.subr.bf16.mxu0 0
      %751 = vmatpush1.bf16.msra.mxu0 %v705
      %752 = vmatprep.subr.bf16.mxu0 0
      %753 = vmatpush1.bf16.msra.mxu0 %v706
      %754 = vmatprep.subr.bf16.mxu0 0
      %755 = vmatpush1.bf16.msra.mxu0 %v707
      %756 = vmatprep.mubr.bf16.mxu0 %v625
      %757 = vmatmul.mubr.bf16.gmra.mrb[0].mxu0 %v624
      %v758 = vpop.f32.mrb[0].mxu0
      %v759 = vadd.f32 0.0, %v758
      %v760 = vpop.f32.mrb[0].mxu0
      %v761 = vpop.f32.mrb[0].mxu0
      %v762 = vpop.f32.mrb[0].mxu0
      %763 = vdwg.mxu0
      %v765 = vunpack.c.l.b16 %v555
      %v766 = vunpack.c.h.b16 %v555
      %v767 = vpack.c.b16 %v765, %v765
      %v768 = vpack.c.b16 %v766, %v766
      %v803 = vunpack.c.l.b16 %v556
      %v804 = vunpack.c.l.b16 %v557
      %v805 = vunpack.c.l.b16 %v558
      %v806 = vunpack.c.l.b16 %v559
      %v807 = vunpack.c.l.b16 %v560
      %v808 = vunpack.c.l.b16 %v561
      %v809 = vunpack.c.l.b16 %v562
      %v810 = vunpack.c.l.b16 %v563
      %v811 = vunpack.c.l.b16 %v564
      %v812 = vunpack.c.l.b16 %v565
      %v813 = vunpack.c.l.b16 %v566
      %v814 = vunpack.c.l.b16 %v567
      %v815 = vunpack.c.l.b16 %v568
      %v816 = vunpack.c.l.b16 %v569
      %v817 = vunpack.c.l.b16 %v570
      %v818 = vunpack.c.l.b16 %v571
      %v819 = vunpack.c.l.b16 %v572
      %v820 = vunpack.c.l.b16 %v573
      %v821 = vunpack.c.l.b16 %v574
      %v822 = vunpack.c.l.b16 %v575
      %v823 = vunpack.c.l.b16 %v576
      %v824 = vunpack.c.l.b16 %v577
      %v825 = vunpack.c.l.b16 %v578
      %v826 = vunpack.c.l.b16 %v579
      %v827 = vunpack.c.l.b16 %v580
      %v828 = vunpack.c.l.b16 %v581
      %v829 = vunpack.c.l.b16 %v582
      %v830 = vunpack.c.l.b16 %v583
      %v831 = vunpack.c.l.b16 %v584
      %v832 = vunpack.c.l.b16 %v585
      %v833 = vunpack.c.l.b16 %v586
      %v834 = vunpack.c.l.b16 %v587
      %v835 = vpack.c.b16 %v804, %v803
      %v836 = vpack.c.b16 %v806, %v805
      %v837 = vpack.c.b16 %v808, %v807
      %v838 = vpack.c.b16 %v810, %v809
      %v839 = vpack.c.b16 %v812, %v811
      %v840 = vpack.c.b16 %v814, %v813
      %v841 = vpack.c.b16 %v816, %v815
      %v842 = vpack.c.b16 %v818, %v817
      %v843 = vpack.c.b16 %v820, %v819
      %v844 = vpack.c.b16 %v822, %v821
      %v845 = vpack.c.b16 %v824, %v823
      %v846 = vpack.c.b16 %v826, %v825
      %v847 = vpack.c.b16 %v828, %v827
      %v848 = vpack.c.b16 %v830, %v829
      %v849 = vpack.c.b16 %v832, %v831
      %v850 = vpack.c.b16 %v834, %v833
      %867 = vmatprep.subr.bf16.mxu0 0
      %868 = vmatpush1.bf16.msra.mxu0 %v835
      %869 = vmatprep.subr.bf16.mxu0 0
      %870 = vmatpush1.bf16.msra.mxu0 %v836
      %871 = vmatprep.subr.bf16.mxu0 0
      %872 = vmatpush1.bf16.msra.mxu0 %v837
      %873 = vmatprep.subr.bf16.mxu0 0
      %874 = vmatpush1.bf16.msra.mxu0 %v838
      %875 = vmatprep.subr.bf16.mxu0 0
      %876 = vmatpush1.bf16.msra.mxu0 %v839
      %877 = vmatprep.subr.bf16.mxu0 0
      %878 = vmatpush1.bf16.msra.mxu0 %v840
      %879 = vmatprep.subr.bf16.mxu0 0
      %880 = vmatpush1.bf16.msra.mxu0 %v841
      %881 = vmatprep.subr.bf16.mxu0 0
      %882 = vmatpush1.bf16.msra.mxu0 %v842
      %883 = vmatprep.subr.bf16.mxu0 0
      %884 = vmatpush1.bf16.msra.mxu0 %v843
      %885 = vmatprep.subr.bf16.mxu0 0
      %886 = vmatpush1.bf16.msra.mxu0 %v844
      %887 = vmatprep.subr.bf16.mxu0 0
      %888 = vmatpush1.bf16.msra.mxu0 %v845
      %889 = vmatprep.subr.bf16.mxu0 0
      %890 = vmatpush1.bf16.msra.mxu0 %v846
      %891 = vmatprep.subr.bf16.mxu0 0
      %892 = vmatpush1.bf16.msra.mxu0 %v847
      %893 = vmatprep.subr.bf16.mxu0 0
      %894 = vmatpush1.bf16.msra.mxu0 %v848
      %895 = vmatprep.subr.bf16.mxu0 0
      %896 = vmatpush1.bf16.msra.mxu0 %v849
      %897 = vmatprep.subr.bf16.mxu0 0
      %898 = vmatpush1.bf16.msra.mxu0 %v850
      %899 = vmatprep.mubr.bf16.mxu0 %v768
      %900 = vmatmul.mubr.bf16.gmra.mrb[0].mxu0 %v767
      %v901 = vpop.f32.mrb[0].mxu0
      %v902 = vadd.f32 %v759, %v901
      %v903 = vpop.f32.mrb[0].mxu0
      %v904 = vpop.f32.mrb[0].mxu0
      %v905 = vpop.f32.mrb[0].mxu0
      %906 = vdwg.mxu0
      %v907 = vld [vmem:[%s5] sm:$0x1]
      %v909 = vlaneseq
      %v910 = vshrl.u32 %v909, 7
      %v911 = vsub.s32 0, %v910
      %v912 = vrot.slane %v907, %v911
      %v914 = vadd.f32 %v902, %v912
      %v915 = vmax.f32 %v914, 0.0
      %v916 = vpack.c.bf16 %v915, %v915
      %917 = vst [vmem:[%s266] sm:$0xf] %v916
      %p918 = scmp.lt.s32.totalorder %s17, 1
      %s919 = scalar_select %p918, %s17, 1
      %s920 = smul.addr %s919, 4
      %s921 = scalar_lea.vmem %s6, %s920
      // Predicated region
      $region45: #{fast_rcnn_forward.1} parent=43 // pred_check
        %p922 = pneg %p171
      $region46: #{fast_rcnn_forward.1} parent=43 // pred_check_branch
        %924 = sbr.rel (%p922) target = $region48
      $region47: #{fast_rcnn_forward.1} parent=43 // pred_region
        _
      $region48: #{fast_rcnn_forward.1} parent=43 // pred_fallthru
        _
    $region44: #{fast_rcnn_forward.1} parent=5 // pred_fallthru
      _
    %p925 = scmp.le.s32.totalorder 2, %s12
    // Predicated region
    $region49: #{fast_rcnn_forward.1} parent=5 // pred_check
      %p926 = pneg %p925
    $region50: #{fast_rcnn_forward.1} parent=5 // pred_check_branch
      %928 = sbr.rel (%p926) target = $region52
    $region51: #{fast_rcnn_forward.1} parent=5 // pred_region
      %s929 = ssub.s32 %s12, 2
      // Predicated region
      $region53: #{fast_rcnn_forward.1} parent=51 // pred_check
        %p930 = pneg %p177
      $region54: #{fast_rcnn_forward.1} parent=51 // pred_check_branch
        %932 = sbr.rel (%p930) target = $region56
      $region55: #{fast_rcnn_forward.1} parent=51 // pred_region
        %p933 = scmp.lt.s32.totalorder %s18, 1
        %s934 = scalar_select %p933, %s18, 1
        %s935 = smul.addr %s934, 4
        %s936 = scalar_lea.vmem %s6, %s935
      $region56: #{fast_rcnn_forward.1} parent=51 // pred_fallthru
        _
    $region52: #{fast_rcnn_forward.1} parent=5 // pred_fallthru
      _
  $region6: #{fast_rcnn_forward.1} parent=0 // loop_footer
    %s16 = sadd.s32 1, %s12
  $region7: #{fast_rcnn_forward.1} parent=0 // loop_footer_branch
    %11 = sbr.rel target = $region3
  $region8: #{fast_rcnn_forward.1} parent=0 // loop_exit
    _

</llo_original>
